<compile_context>
chip_gen: v7x
topology: tpu7x:2x2x1
jax: 0.10.0
libtpu: 0.0.40
codegen_flags: <defaults>
</compile_context>

<pallas_src>
import functools

import numpy as np
import jax
import jax.numpy as jnp
from jax.experimental import pallas as pl
from jax.experimental.pallas import tpu as pltpu  # noqa: F401  (TPU backend)

LANE = 128


def _round_up(x, m):
    return (x + m - 1) // m * m


def _fullblock(shape):
    """Whole-array block (no grid)."""
    return pl.BlockSpec(shape, lambda: (0,) * len(shape))


# ----------------------------------------------------------------------------
# Pallas kernels
# ----------------------------------------------------------------------------
def _conv_relu_pool_kernel(mp_pad, w_ref, b_ref, p_ref, o_ref):
    """Fused valid-conv (as one GEMM) + 2x2/stride-2 max-pool + bias + ReLU.

    w_ref: (Cout, K)        bf16 flattened conv weight, K = Cin*KH*KW
    b_ref: (Cout, 1)        f32 bias
    p_ref: (K, 4*mp_pad)    bf16 im2col patches; one mp_pad-wide lane slab per
                            pooling corner, zero-padded lanes beyond mp
    o_ref: (Cout, mp_pad)   f32 pooled activations, channel-major, lane-dense
    """
    g = jnp.dot(w_ref[...], p_ref[...], preferred_element_type=jnp.float32)
    # Max over the four 128-aligned pooling-corner slabs (static lane slices).
    m = jnp.maximum(
        jnp.maximum(g[:, 0 * mp_pad:1 * mp_pad], g[:, 1 * mp_pad:2 * mp_pad]),
        jnp.maximum(g[:, 2 * mp_pad:3 * mp_pad], g[:, 3 * mp_pad:4 * mp_pad]))
    o_ref[...] = jnp.maximum(m + b_ref[...], 0.0).astype(o_ref.dtype)


def _fc_head_kernel(x_ref, w1_ref, b1_ref, w2_ref, b2_ref, w3_ref, b3_ref,
                    o_ref):
    """fc1+ReLU -> fc2+ReLU -> fc3, all VMEM resident, 128-lane-dense widths."""
    h = jnp.dot(x_ref[...], w1_ref[...], preferred_element_type=jnp.float32)
    h = jnp.maximum(h + b1_ref[...], 0.0)
    h = jnp.dot(h.astype(jnp.bfloat16), w2_ref[...],
                preferred_element_type=jnp.float32)
    h = jnp.maximum(h + b2_ref[...], 0.0)
    o = jnp.dot(h.astype(jnp.bfloat16), w3_ref[...],
                preferred_element_type=jnp.float32)
    o_ref[...] = (o + b3_ref[...]).astype(o_ref.dtype)


# ----------------------------------------------------------------------------
# Host-side patch (im2col) builder: one gather, ~6 XLA ops per conv layer
# ----------------------------------------------------------------------------
def _build_corner_patches(a_cm, kh, kw):
    """im2col for all 4 pooling corners in one gather.

    a_cm: (Cin, N, H, W) channel-major activations (f32).
    Returns (patches, poh, pow, mp, mp_pad) with
      patches[c*KH*KW + i*KW + j, q*mp_pad + n*POH*POW + r*POW + s]
          = a_cm[c, n, 2r + qi + i, 2s + qj + j]     (zero in padded lanes)
    K ordering (cin, kh, kw) matches PyTorch's weight.reshape(Cout, -1).
    """
    c, n, h, w = a_cm.shape
    oh, ow = h - kh + 1, w - kw + 1
    poh, pow_ = oh // 2, ow // 2
    mp = n * poh * pow_
    mp_pad = _round_up(mp, LANE)

    # Static gather indices (numpy -> baked-in constant).
    idx = np.empty((4, kh * kw, poh, pow_), np.int32)
    q = 0
    for qi in (0, 1):
        for qj in (0, 1):
            for i in range(kh):
                for j in range(kw):
                    rows = 2 * np.arange(poh)[:, None] + qi + i
                    cols = 2 * np.arange(pow_)[None, :] + qj + j
                    idx[q, i * kw + j] = rows * w + cols
            q += 1

    p = jnp.take(a_cm.reshape(c, n, h * w), jnp.asarray(idx.reshape(-1)),
                 axis=2)                              # (C, N, 4*KHKW*POH*POW)
    p = p.reshape(c, n, 4, kh * kw, poh * pow_)       # (C, N, Q, IJ, M)
    p = p.transpose(0, 3, 2, 1, 4)                    # (C, IJ, Q, N, M)
    p = p.reshape(c * kh * kw, 4, mp)
    p = jnp.pad(p, ((0, 0), (0, 0), (0, mp_pad - mp)))
    p = p.reshape(c * kh * kw, 4 * mp_pad).astype(jnp.bfloat16)
    return p, poh, pow_, mp, mp_pad


# ----------------------------------------------------------------------------
# Wrappers
# ----------------------------------------------------------------------------
def pallas_conv_relu_pool(a_cm, weight, bias):
    """a_cm: (Cin, N, H, W). Returns ((Cout, mp_pad) f32, poh, pow, mp)."""
    cin, n, h, w = a_cm.shape
    cout, _, kh, kw = weight.shape
    patches, poh, pow_, mp, mp_pad = _build_corner_patches(a_cm, kh, kw)
    k = cin * kh * kw
    w2d = weight.reshape(cout, k).astype(jnp.bfloat16)
    b2d = bias.reshape(cout, 1).astype(jnp.float32)

    cost = pl.CostEstimate(
        flops=2 * cout * k * 4 * mp_pad,
        transcendentals=0,
        bytes_accessed=2 * (cout * k + k * 4 * mp_pad)
        + 4 * (cout + cout * mp_pad))

    out = pl.pallas_call(
        functools.partial(_conv_relu_pool_kernel, mp_pad),
        out_shape=jax.ShapeDtypeStruct((cout, mp_pad), jnp.float32),
        in_specs=[_fullblock((cout, k)), _fullblock((cout, 1)),
                  _fullblock((k, 4 * mp_pad))],
        out_specs=_fullblock((cout, mp_pad)),
        cost_estimate=cost,
    )(w2d, b2d, patches)
    return out, poh, pow_, mp


def pallas_fc_head(x_flat, w1, b1, w2, b2, w3, b3):
    """x_flat: (N, D0) f32; w*: PyTorch Linear weights (out, in); b*: (out,)."""
    n, d0 = x_flat.shape
    d1, d2, d3 = w1.shape[0], w2.shape[0], w3.shape[0]
    d0p, d1p, d2p, d3p = (_round_up(d, LANE) for d in (d0, d1, d2, d3))

    def pad_wt(wt, rp, cp):
        wt_t = wt.T  # (in, out)
        return jnp.pad(
            wt_t, ((0, rp - wt_t.shape[0]), (0, cp - wt_t.shape[1]))
        ).astype(jnp.bfloat16)

    def pad_b(b, cp):
        return jnp.pad(b, (0, cp - b.shape[0])).reshape(1, cp).astype(
            jnp.float32)

    xp = jnp.pad(x_flat, ((0, 0), (0, d0p - d0))).astype(jnp.bfloat16)
    w1p, w2p, w3p = pad_wt(w1, d0p, d1p), pad_wt(w2, d1p, d2p), pad_wt(w3, d2p, d3p)
    b1p, b2p, b3p = pad_b(b1, d1p), pad_b(b2, d2p), pad_b(b3, d3p)

    cost = pl.CostEstimate(
        flops=2 * n * (d0p * d1p + d1p * d2p + d2p * d3p),
        transcendentals=0,
        bytes_accessed=2 * (n * d0p + d0p * d1p + d1p * d2p + d2p * d3p)
        + 4 * (d1p + d2p + d3p + n * d3p))

    out = pl.pallas_call(
        _fc_head_kernel,
        out_shape=jax.ShapeDtypeStruct((n, d3p), jnp.float32),
        in_specs=[_fullblock((n, d0p)),
                  _fullblock((d0p, d1p)), _fullblock((1, d1p)),
                  _fullblock((d1p, d2p)), _fullblock((1, d2p)),
                  _fullblock((d2p, d3p)), _fullblock((1, d3p))],
        out_specs=_fullblock((n, d3p)),
        cost_estimate=cost,
    )(xp, w1p, b1p, w2p, b2p, w3p, b3p)
    return out[:, :d3]


# ----------------------------------------------------------------------------
# LeNet_adv forward
# ----------------------------------------------------------------------------
def init_params(key, w=1):
    w = int(w)
    keys = jax.random.split(key, 10)

    def u(k, shape, fan_in):
        bound = 1.0 / jnp.sqrt(fan_in)
        return jax.random.uniform(k, shape, jnp.float32, -bound, bound)

    return {
        "conv1_w": u(keys[0], (6 * w, 3, 5, 5), 3 * 25),
        "conv1_b": u(keys[1], (6 * w,), 3 * 25),
        "conv2_w": u(keys[2], (16 * w, 6 * w, 5, 5), 6 * w * 25),
        "conv2_b": u(keys[3], (16 * w,), 6 * w * 25),
        "fc1_w": u(keys[4], (120 * w, 16 * 5 * 5 * w), 16 * 5 * 5 * w),
        "fc1_b": u(keys[5], (120 * w,), 16 * 5 * 5 * w),
        "fc2_w": u(keys[6], (84 * w, 120 * w), 120 * w),
        "fc2_b": u(keys[7], (84 * w,), 120 * w),
        "fc3_w": u(keys[8], (10, 84 * w), 84 * w),
        "fc3_b": u(keys[9], (10,), 84 * w),
    }


def lenet_adv_forward(params, x):
    n = x.shape[0]
    # NCHW -> channel-major (C, N, H, W) once; the conv trunk stays
    # channel-major so no transposes are needed between the two conv kernels.
    a = jnp.transpose(x, (1, 0, 2, 3)).astype(jnp.float32)

    # conv1 + relu + pool (one fused kernel, one MXU dot)
    z1, poh1, pow1, mp1 = pallas_conv_relu_pool(a, params["conv1_w"],
                                                params["conv1_b"])
    c1 = params["conv1_w"].shape[0]
    a2 = z1[:, :mp1].reshape(c1, n, poh1, pow1)

    # conv2 + relu + pool (one fused kernel, one MXU dot)
    z2, poh2, pow2, mp2 = pallas_conv_relu_pool(a2, params["conv2_w"],
                                                params["conv2_b"])
    c2 = params["conv2_w"].shape[0]

    # PyTorch out.view(N, -1): features ordered (c, h, w).
    # TODO(synk): fold this tiny (N x 400) reorder into the fc kernel to drop
    # one XLA op between the two Pallas calls.
    x_flat = (z2[:, :mp2].reshape(c2, n, poh2 * pow2)
              .transpose(1, 0, 2)
              .reshape(n, c2 * poh2 * pow2))

    # fc1 + relu + fc2 + relu + fc3 (one fused kernel, 128-padded widths)
    return pallas_fc_head(
        x_flat,
        params["fc1_w"], params["fc1_b"],
        params["fc2_w"], params["fc2_b"],
        params["fc3_w"], params["fc3_b"])


# ----------------------------------------------------------------------------
# Pure-JAX f32 reference (sanity check)
# ----------------------------------------------------------------------------
def _ref_forward(params, x):
    def conv(x, w, b):
        y = jax.lax.conv_general_dilated(
            x, w, window_strides=(1, 1), padding="VALID",
            dimension_numbers=("NCHW", "OIHW", "NCHW"))
        return y + b.reshape(1, -1, 1, 1)

    def maxpool2(x):
        return jax.lax.reduce_window(x, -jnp.inf, jax.lax.max,
                                     (1, 1, 2, 2), (1, 1, 2, 2), "VALID")

    o = maxpool2(jax.nn.relu(conv(x, params["conv1_w"], params["conv1_b"])))
    o = maxpool2(jax.nn.relu(conv(o, params["conv2_w"], params["conv2_b"])))
    o = o.reshape(o.shape[0], -1)
    o = jax.nn.relu(o @ params["fc1_w"].T + params["fc1_b"])
    o = jax.nn.relu(o @ params["fc2_w"].T + params["fc2_b"])
    return o @ params["fc3_w"].T + params["fc3_b"]


if __name__ == "__main__":
    key = jax.random.PRNGKey(0)
    pkey, xkey = jax.random.split(key)
    params = init_params(pkey, w=1)
    # CIFAR-10 input implied by the module's fc1 (16*5*5): N=2, C=3, H=W=32
    x = jax.random.normal(xkey, (2, 3, 32, 32), dtype=jnp.float32)

    logits = jax.jit(lenet_adv_forward)(params, x)
    jax.block_until_ready(logits)
    assert logits.shape == (2, 10), logits.shape

    ref = _ref_forward(params, x)
    max_err = float(jnp.max(jnp.abs(logits - ref)))
    # bf16 MXU operands (f32 accumulation) bound the achievable tolerance;
    # typical error vs the f32 reference is ~1e-3 on O(0.1) logits.
    assert max_err < 5e-2, f"mismatch vs reference: max abs err {max_err}"
    print("KERNEL_OK")
</pallas_src>

<mosaic_0001>
module attributes {stable_mosaic.version = 11 : i64} {
  func.func @_conv_relu_pool_kernel(%arg0: memref<6x75xbf16, #tpu.memory_space<vmem>>, %arg1: memref<6x1xf32, #tpu.memory_space<vmem>>, %arg2: memref<75x2048xbf16, #tpu.memory_space<vmem>>, %arg3: memref<6x512xf32, #tpu.memory_space<vmem>>) attributes {dimension_semantics = [], scalar_prefetch = 0 : i64, scratch_operands = 0 : i64, tpu.core_type = #tpu.core_type<tc>} {
    %c0 = arith.constant 0 : index
    %c0_0 = arith.constant 0 : index
    %0 = vector.load %arg0[%c0, %c0_0] : memref<6x75xbf16, #tpu.memory_space<vmem>>, vector<6x75xbf16>
    %c0_1 = arith.constant 0 : index
    %c0_2 = arith.constant 0 : index
    %1 = vector.load %arg2[%c0_1, %c0_2] : memref<75x2048xbf16, #tpu.memory_space<vmem>>, vector<75x2048xbf16>
    %cst = arith.constant dense<0.000000e+00> : vector<6x2048xf32>
    %2 = tpu.matmul %0, %1, %cst {dimension_numbers = #tpu.dot_dimension_numbers<[1], [0], [0], [1], [0, 0, 1, 1], [], []>} : vector<6x75xbf16>, vector<75x2048xbf16>, vector<6x2048xf32> -> vector<6x2048xf32>
    %3 = vector.extract_strided_slice %2 {offsets = [0, 0], sizes = [6, 512], strides = [1, 1]} : vector<6x2048xf32> to vector<6x512xf32>
    %4 = vector.extract_strided_slice %2 {offsets = [0, 512], sizes = [6, 512], strides = [1, 1]} : vector<6x2048xf32> to vector<6x512xf32>
    %5 = arith.maximumf %3, %4 : vector<6x512xf32>
    %6 = vector.extract_strided_slice %2 {offsets = [0, 1024], sizes = [6, 512], strides = [1, 1]} : vector<6x2048xf32> to vector<6x512xf32>
    %7 = vector.extract_strided_slice %2 {offsets = [0, 1536], sizes = [6, 512], strides = [1, 1]} : vector<6x2048xf32> to vector<6x512xf32>
    %8 = arith.maximumf %6, %7 : vector<6x512xf32>
    %9 = arith.maximumf %5, %8 : vector<6x512xf32>
    %c0_3 = arith.constant 0 : index
    %c0_4 = arith.constant 0 : index
    %10 = vector.load %arg1[%c0_3, %c0_4] : memref<6x1xf32, #tpu.memory_space<vmem>>, vector<6x1xf32>
    %11 = vector.broadcast %10 : vector<6x1xf32> to vector<6x512xf32>
    %12 = arith.addf %9, %11 : vector<6x512xf32>
    %cst_5 = arith.constant 0.000000e+00 : f32
    %13 = vector.broadcast %cst_5 : f32 to vector<6x512xf32>
    %14 = arith.maximumf %12, %13 : vector<6x512xf32>
    %c0_6 = arith.constant 0 : index
    %c0_7 = arith.constant 0 : index
    %15 = vector.load %arg3[%c0_6, %c0_7] : memref<6x512xf32, #tpu.memory_space<vmem>>, vector<6x512xf32>
    tpu.vector_store %arg3[%c0_6, %c0_7], %14 {strides = array<i32>} : memref<6x512xf32, #tpu.memory_space<vmem>>, vector<6x512xf32>,
    return
  }
}

module attributes {stable_mosaic.version = 11 : i64} {
  func.func @_conv_relu_pool_kernel(%arg0: memref<16x150xbf16, #tpu.memory_space<vmem>>, %arg1: memref<16x1xf32, #tpu.memory_space<vmem>>, %arg2: memref<150x512xbf16, #tpu.memory_space<vmem>>, %arg3: memref<16x128xf32, #tpu.memory_space<vmem>>) attributes {dimension_semantics = [], scalar_prefetch = 0 : i64, scratch_operands = 0 : i64, tpu.core_type = #tpu.core_type<tc>} {
    %c0 = arith.constant 0 : index
    %c0_0 = arith.constant 0 : index
    %0 = vector.load %arg0[%c0, %c0_0] : memref<16x150xbf16, #tpu.memory_space<vmem>>, vector<16x150xbf16>
    %c0_1 = arith.constant 0 : index
    %c0_2 = arith.constant 0 : index
    %1 = vector.load %arg2[%c0_1, %c0_2] : memref<150x512xbf16, #tpu.memory_space<vmem>>, vector<150x512xbf16>
    %cst = arith.constant dense<0.000000e+00> : vector<16x512xf32>
    %2 = tpu.matmul %0, %1, %cst {dimension_numbers = #tpu.dot_dimension_numbers<[1], [0], [0], [1], [0, 0, 1, 1], [], []>} : vector<16x150xbf16>, vector<150x512xbf16>, vector<16x512xf32> -> vector<16x512xf32>
    %3 = vector.extract_strided_slice %2 {offsets = [0, 0], sizes = [16, 128], strides = [1, 1]} : vector<16x512xf32> to vector<16x128xf32>
    %4 = vector.extract_strided_slice %2 {offsets = [0, 128], sizes = [16, 128], strides = [1, 1]} : vector<16x512xf32> to vector<16x128xf32>
    %5 = arith.maximumf %3, %4 : vector<16x128xf32>
    %6 = vector.extract_strided_slice %2 {offsets = [0, 256], sizes = [16, 128], strides = [1, 1]} : vector<16x512xf32> to vector<16x128xf32>
    %7 = vector.extract_strided_slice %2 {offsets = [0, 384], sizes = [16, 128], strides = [1, 1]} : vector<16x512xf32> to vector<16x128xf32>
    %8 = arith.maximumf %6, %7 : vector<16x128xf32>
    %9 = arith.maximumf %5, %8 : vector<16x128xf32>
    %c0_3 = arith.constant 0 : index
    %c0_4 = arith.constant 0 : index
    %10 = vector.load %arg1[%c0_3, %c0_4] : memref<16x1xf32, #tpu.memory_space<vmem>>, vector<16x1xf32>
    %11 = vector.broadcast %10 : vector<16x1xf32> to vector<16x128xf32>
    %12 = arith.addf %9, %11 : vector<16x128xf32>
    %cst_5 = arith.constant 0.000000e+00 : f32
    %13 = vector.broadcast %cst_5 : f32 to vector<16x128xf32>
    %14 = arith.maximumf %12, %13 : vector<16x128xf32>
    %c0_6 = arith.constant 0 : index
    %c0_7 = arith.constant 0 : index
    %15 = vector.load %arg3[%c0_6, %c0_7] : memref<16x128xf32, #tpu.memory_space<vmem>>, vector<16x128xf32>
    tpu.vector_store %arg3[%c0_6, %c0_7], %14 {strides = array<i32>} : memref<16x128xf32, #tpu.memory_space<vmem>>, vector<16x128xf32>,
    return
  }
}

module attributes {stable_mosaic.version = 11 : i64} {
  func.func @_fc_head_kernel(%arg0: memref<2x512xbf16, #tpu.memory_space<vmem>>, %arg1: memref<512x128xbf16, #tpu.memory_space<vmem>>, %arg2: memref<1x128xf32, #tpu.memory_space<vmem>>, %arg3: memref<128x128xbf16, #tpu.memory_space<vmem>>, %arg4: memref<1x128xf32, #tpu.memory_space<vmem>>, %arg5: memref<128x128xbf16, #tpu.memory_space<vmem>>, %arg6: memref<1x128xf32, #tpu.memory_space<vmem>>, %arg7: memref<2x128xf32, #tpu.memory_space<vmem>>) attributes {dimension_semantics = [], scalar_prefetch = 0 : i64, scratch_operands = 0 : i64, tpu.core_type = #tpu.core_type<tc>} {
    %c0 = arith.constant 0 : index
    %c0_0 = arith.constant 0 : index
    %0 = vector.load %arg0[%c0, %c0_0] : memref<2x512xbf16, #tpu.memory_space<vmem>>, vector<2x512xbf16>
    %c0_1 = arith.constant 0 : index
    %c0_2 = arith.constant 0 : index
    %1 = vector.load %arg1[%c0_1, %c0_2] : memref<512x128xbf16, #tpu.memory_space<vmem>>, vector<512x128xbf16>
    %cst = arith.constant dense<0.000000e+00> : vector<2x128xf32>
    %2 = tpu.matmul %0, %1, %cst {dimension_numbers = #tpu.dot_dimension_numbers<[1], [0], [0], [1], [0, 0, 1, 1], [], []>} : vector<2x512xbf16>, vector<512x128xbf16>, vector<2x128xf32> -> vector<2x128xf32>
    %c0_3 = arith.constant 0 : index
    %c0_4 = arith.constant 0 : index
    %3 = vector.load %arg2[%c0_3, %c0_4] : memref<1x128xf32, #tpu.memory_space<vmem>>, vector<1x128xf32>
    %4 = vector.broadcast %3 : vector<1x128xf32> to vector<2x128xf32>
    %5 = arith.addf %2, %4 : vector<2x128xf32>
    %cst_5 = arith.constant 0.000000e+00 : f32
    %6 = vector.broadcast %cst_5 : f32 to vector<2x128xf32>
    %7 = arith.maximumf %5, %6 : vector<2x128xf32>
    %8 = arith.truncf %7 : vector<2x128xf32> to vector<2x128xbf16>
    %c0_6 = arith.constant 0 : index
    %c0_7 = arith.constant 0 : index
    %9 = vector.load %arg3[%c0_6, %c0_7] : memref<128x128xbf16, #tpu.memory_space<vmem>>, vector<128x128xbf16>
    %cst_8 = arith.constant dense<0.000000e+00> : vector<2x128xf32>
    %10 = tpu.matmul %8, %9, %cst_8 {dimension_numbers = #tpu.dot_dimension_numbers<[1], [0], [0], [1], [0, 0, 1, 1], [], []>} : vector<2x128xbf16>, vector<128x128xbf16>, vector<2x128xf32> -> vector<2x128xf32>
    %c0_9 = arith.constant 0 : index
    %c0_10 = arith.constant 0 : index
    %11 = vector.load %arg4[%c0_9, %c0_10] : memref<1x128xf32, #tpu.memory_space<vmem>>, vector<1x128xf32>
    %12 = vector.broadcast %11 : vector<1x128xf32> to vector<2x128xf32>
    %13 = arith.addf %10, %12 : vector<2x128xf32>
    %cst_11 = arith.constant 0.000000e+00 : f32
    %14 = vector.broadcast %cst_11 : f32 to vector<2x128xf32>
    %15 = arith.maximumf %13, %14 : vector<2x128xf32>
    %16 = arith.truncf %15 : vector<2x128xf32> to vector<2x128xbf16>
    %c0_12 = arith.constant 0 : index
    %c0_13 = arith.constant 0 : index
    %17 = vector.load %arg5[%c0_12, %c0_13] : memref<128x128xbf16, #tpu.memory_space<vmem>>, vector<128x128xbf16>
    %cst_14 = arith.constant dense<0.000000e+00> : vector<2x128xf32>
    %18 = tpu.matmul %16, %17, %cst_14 {dimension_numbers = #tpu.dot_dimension_numbers<[1], [0], [0], [1], [0, 0, 1, 1], [], []>} : vector<2x128xbf16>, vector<128x128xbf16>, vector<2x128xf32> -> vector<2x128xf32>
    %c0_15 = arith.constant 0 : index
    %c0_16 = arith.constant 0 : index
    %19 = vector.load %arg6[%c0_15, %c0_16] : memref<1x128xf32, #tpu.memory_space<vmem>>, vector<1x128xf32>
    %20 = vector.broadcast %19 : vector<1x128xf32> to vector<2x128xf32>
    %21 = arith.addf %18, %20 : vector<2x128xf32>
    %c0_17 = arith.constant 0 : index
    %c0_18 = arith.constant 0 : index
    %22 = vector.load %arg7[%c0_17, %c0_18] : memref<2x128xf32, #tpu.memory_space<vmem>>, vector<2x128xf32>
    tpu.vector_store %arg7[%c0_17, %c0_18], %21 {strides = array<i32>} : memref<2x128xf32, #tpu.memory_space<vmem>>, vector<2x128xf32>,
    return
  }
}

</mosaic_0001>

<llo_original>
// kernel: lenet_adv_forward.3
$region0: #{lenet_adv_forward.3}
  #allocation0 [shape = 'u32[]', space=smem, size = 0x4, offset = 0x4, fixed_abs, tag = 'smem constant byte address 0x4 - core index']
  #allocation1 [shape = 'u32[144,128]{1,0:T(1,128)}', space=vmem, size = 0x12000, scoped, tag = 'internal scratch']
  %s0 = inlined_call_operand.vmem [shape: bf16[6,75], index: 0, kind: input, shape index: {}]
  %s1 = inlined_call_operand.vmem [shape: f32[6,1], index: 1, kind: input, shape index: {}]
  %s2 = inlined_call_operand.vmem [shape: bf16[75,2048], index: 2, kind: input, shape index: {}]
  %s3 = inlined_call_operand.vmem [shape: f32[6,512], index: 3, kind: output, shape index: {}]
  %s4 = sld [smem:[#allocation0]]
  $region22: #{lenet_adv_forward.3} parent=0
    _
  %s6 = ssub.s32 1, %s4
  %s7 = scalar_select 0, %s6, %s4
  // Predicated region
  $region2: #{lenet_adv_forward.3} parent=0 // pred_check
    _
  $region3: #{lenet_adv_forward.3} parent=0 // pred_check_branch
    %9 = sbr.rel (0) target = $region5
  $region4: #{lenet_adv_forward.3} parent=0 // pred_region
    _
  $region5: #{lenet_adv_forward.3} parent=0 // pred_fallthru
    _
  // Predicated region
  $region6: #{lenet_adv_forward.3} parent=0 // pred_check
    _
  $region7: #{lenet_adv_forward.3} parent=0 // pred_check_branch
    %11 = sbr.rel (0) target = $region9
  $region8: #{lenet_adv_forward.3} parent=0 // pred_region
    _
  $region9: #{lenet_adv_forward.3} parent=0 // pred_fallthru
    _
  // Predicated region
  $region10: #{lenet_adv_forward.3} parent=0 // pred_check
    _
  $region11: #{lenet_adv_forward.3} parent=0 // pred_check_branch
    %13 = sbr.rel (0) target = $region13
  $region12: #{lenet_adv_forward.3} parent=0 // pred_region
    _
  $region13: #{lenet_adv_forward.3} parent=0 // pred_fallthru
    _
  %v15 = vld [vmem:[%s0] sm:$0x7]
  %v16 = vld [vmem:[%s2] sm:$0xff]
  %v17 = vld [vmem:[%s2 + $0x8] sm:$0xff]
  %v18 = vld [vmem:[%s2 + $0x10] sm:$0xff]
  %v19 = vld [vmem:[%s2 + $0x18] sm:$0xff]
  %v20 = vld [vmem:[%s2 + $0x20] sm:$0xff]
  %v21 = vld [vmem:[%s2 + $0x28] sm:$0xff]
  %v22 = vld [vmem:[%s2 + $0x30] sm:$0xff]
  %v23 = vld [vmem:[%s2 + $0x38] sm:$0xff]
  %v24 = vld [vmem:[%s2 + $0x40] sm:$0xff]
  %v25 = vld [vmem:[%s2 + $0x48] sm:$0xff]
  %v26 = vld [vmem:[%s2 + $0x50] sm:$0xff]
  %v27 = vld [vmem:[%s2 + $0x58] sm:$0xff]
  %v28 = vld [vmem:[%s2 + $0x60] sm:$0xff]
  %v29 = vld [vmem:[%s2 + $0x68] sm:$0xff]
  %v30 = vld [vmem:[%s2 + $0x70] sm:$0xff]
  %v31 = vld [vmem:[%s2 + $0x78] sm:$0xff]
  %v32 = vld [vmem:[%s2 + $0x80] sm:$0xff]
  %v33 = vld [vmem:[%s2 + $0x88] sm:$0xff]
  %v34 = vld [vmem:[%s2 + $0x90] sm:$0xff]
  %v35 = vld [vmem:[%s2 + $0x98] sm:$0xff]
  %v36 = vld [vmem:[%s2 + $0xa0] sm:$0xff]
  %v37 = vld [vmem:[%s2 + $0xa8] sm:$0xff]
  %v38 = vld [vmem:[%s2 + $0xb0] sm:$0xff]
  %v39 = vld [vmem:[%s2 + $0xb8] sm:$0xff]
  %v40 = vld [vmem:[%s2 + $0xc0] sm:$0xff]
  %v41 = vld [vmem:[%s2 + $0xc8] sm:$0xff]
  %v42 = vld [vmem:[%s2 + $0xd0] sm:$0xff]
  %v43 = vld [vmem:[%s2 + $0xd8] sm:$0xff]
  %v44 = vld [vmem:[%s2 + $0xe0] sm:$0xff]
  %v45 = vld [vmem:[%s2 + $0xe8] sm:$0xff]
  %v46 = vld [vmem:[%s2 + $0xf0] sm:$0xff]
  %v47 = vld [vmem:[%s2 + $0xf8] sm:$0xff]
  %v48 = vld [vmem:[%s2 + $0x100] sm:$0xff]
  %v49 = vld [vmem:[%s2 + $0x108] sm:$0xff]
  %v50 = vld [vmem:[%s2 + $0x110] sm:$0xff]
  %v51 = vld [vmem:[%s2 + $0x118] sm:$0xff]
  %v52 = vld [vmem:[%s2 + $0x120] sm:$0xff]
  %v53 = vld [vmem:[%s2 + $0x128] sm:$0xff]
  %v54 = vld [vmem:[%s2 + $0x130] sm:$0xff]
  %v55 = vld [vmem:[%s2 + $0x138] sm:$0xff]
  %v56 = vld [vmem:[%s2 + $0x140] sm:$0xff]
  %v57 = vld [vmem:[%s2 + $0x148] sm:$0xff]
  %v58 = vld [vmem:[%s2 + $0x150] sm:$0xff]
  %v59 = vld [vmem:[%s2 + $0x158] sm:$0xff]
  %v60 = vld [vmem:[%s2 + $0x160] sm:$0xff]
  %v61 = vld [vmem:[%s2 + $0x168] sm:$0xff]
  %v62 = vld [vmem:[%s2 + $0x170] sm:$0xff]
  %v63 = vld [vmem:[%s2 + $0x178] sm:$0xff]
  %v64 = vld [vmem:[%s2 + $0x180] sm:$0xff]
  %v65 = vld [vmem:[%s2 + $0x188] sm:$0xff]
  %v66 = vld [vmem:[%s2 + $0x190] sm:$0xff]
  %v67 = vld [vmem:[%s2 + $0x198] sm:$0xff]
  %v68 = vld [vmem:[%s2 + $0x1a0] sm:$0xff]
  %v69 = vld [vmem:[%s2 + $0x1a8] sm:$0xff]
  %v70 = vld [vmem:[%s2 + $0x1b0] sm:$0xff]
  %v71 = vld [vmem:[%s2 + $0x1b8] sm:$0xff]
  %v72 = vld [vmem:[%s2 + $0x1c0] sm:$0xff]
  %v73 = vld [vmem:[%s2 + $0x1c8] sm:$0xff]
  %v74 = vld [vmem:[%s2 + $0x1d0] sm:$0xff]
  %v75 = vld [vmem:[%s2 + $0x1d8] sm:$0xff]
  %v76 = vld [vmem:[%s2 + $0x1e0] sm:$0xff]
  %v77 = vld [vmem:[%s2 + $0x1e8] sm:$0xff]
  %v78 = vld [vmem:[%s2 + $0x1f0] sm:$0xff]
  %v79 = vld [vmem:[%s2 + $0x1f8] sm:$0xff]
  %v80 = vld [vmem:[%s2 + $0x200] sm:$0xff]
  %v81 = vld [vmem:[%s2 + $0x208] sm:$0xff]
  %v82 = vld [vmem:[%s2 + $0x210] sm:$0xff]
  %v83 = vld [vmem:[%s2 + $0x218] sm:$0xff]
  %v84 = vld [vmem:[%s2 + $0x220] sm:$0xff]
  %v85 = vld [vmem:[%s2 + $0x228] sm:$0xff]
  %v86 = vld [vmem:[%s2 + $0x230] sm:$0xff]
  %v87 = vld [vmem:[%s2 + $0x238] sm:$0xff]
  %v88 = vld [vmem:[%s2 + $0x240] sm:$0x33]
  %v89 = vld [vmem:[%s2 + $0x248] sm:$0x33]
  %v90 = vld [vmem:[%s2 + $0x250] sm:$0x33]
  %v91 = vld [vmem:[%s2 + $0x258] sm:$0x33]
  %v92 = vld [vmem:[%s2 + $0x260] sm:$0x33]
  %v93 = vld [vmem:[%s2 + $0x268] sm:$0x33]
  %v94 = vld [vmem:[%s2 + $0x270] sm:$0x33]
  %v95 = vld [vmem:[%s2 + $0x278] sm:$0x33]
  %v176 = vunpack.c.l.b16 %v16
  %v177 = vunpack.c.h.b16 %v16
  %v178 = vunpack.c.l.b16 %v17
  %v179 = vunpack.c.h.b16 %v17
  %v180 = vunpack.c.l.b16 %v18
  %v181 = vunpack.c.h.b16 %v18
  %v182 = vunpack.c.l.b16 %v19
  %v183 = vunpack.c.h.b16 %v19
  %v184 = vunpack.c.l.b16 %v20
  %v185 = vunpack.c.h.b16 %v20
  %v186 = vunpack.c.l.b16 %v21
  %v187 = vunpack.c.h.b16 %v21
  %v188 = vunpack.c.l.b16 %v22
  %v189 = vunpack.c.h.b16 %v22
  %v190 = vunpack.c.l.b16 %v23
  %v191 = vunpack.c.h.b16 %v23
  %v192 = vunpack.c.l.b16 %v24
  %v193 = vunpack.c.h.b16 %v24
  %v194 = vunpack.c.l.b16 %v25
  %v195 = vunpack.c.h.b16 %v25
  %v196 = vunpack.c.l.b16 %v26
  %v197 = vunpack.c.h.b16 %v26
  %v198 = vunpack.c.l.b16 %v27
  %v199 = vunpack.c.h.b16 %v27
  %v200 = vunpack.c.l.b16 %v28
  %v201 = vunpack.c.h.b16 %v28
  %v202 = vunpack.c.l.b16 %v29
  %v203 = vunpack.c.h.b16 %v29
  %v204 = vunpack.c.l.b16 %v30
  %v205 = vunpack.c.h.b16 %v30
  %v206 = vunpack.c.l.b16 %v31
  %v207 = vunpack.c.h.b16 %v31
  %v208 = vunpack.c.l.b16 %v32
  %v209 = vunpack.c.h.b16 %v32
  %v210 = vunpack.c.l.b16 %v33
  %v211 = vunpack.c.h.b16 %v33
  %v212 = vunpack.c.l.b16 %v34
  %v213 = vunpack.c.h.b16 %v34
  %v214 = vunpack.c.l.b16 %v35
  %v215 = vunpack.c.h.b16 %v35
  %v216 = vunpack.c.l.b16 %v36
  %v217 = vunpack.c.h.b16 %v36
  %v218 = vunpack.c.l.b16 %v37
  %v219 = vunpack.c.h.b16 %v37
  %v220 = vunpack.c.l.b16 %v38
  %v221 = vunpack.c.h.b16 %v38
  %v222 = vunpack.c.l.b16 %v39
  %v223 = vunpack.c.h.b16 %v39
  %v224 = vunpack.c.l.b16 %v40
  %v225 = vunpack.c.h.b16 %v40
  %v226 = vunpack.c.l.b16 %v41
  %v227 = vunpack.c.h.b16 %v41
  %v228 = vunpack.c.l.b16 %v42
  %v229 = vunpack.c.h.b16 %v42
  %v230 = vunpack.c.l.b16 %v43
  %v231 = vunpack.c.h.b16 %v43
  %v232 = vunpack.c.l.b16 %v44
  %v233 = vunpack.c.h.b16 %v44
  %v234 = vunpack.c.l.b16 %v45
  %v235 = vunpack.c.h.b16 %v45
  %v236 = vunpack.c.l.b16 %v46
  %v237 = vunpack.c.h.b16 %v46
  %v238 = vunpack.c.l.b16 %v47
  %v239 = vunpack.c.h.b16 %v47
  %v240 = vunpack.c.l.b16 %v48
  %v241 = vunpack.c.h.b16 %v48
  %v242 = vunpack.c.l.b16 %v49
  %v243 = vunpack.c.h.b16 %v49
  %v244 = vunpack.c.l.b16 %v50
  %v245 = vunpack.c.h.b16 %v50
  %v246 = vunpack.c.l.b16 %v51
  %v247 = vunpack.c.h.b16 %v51
  %v248 = vunpack.c.l.b16 %v52
  %v249 = vunpack.c.h.b16 %v52
  %v250 = vunpack.c.l.b16 %v53
  %v251 = vunpack.c.h.b16 %v53
  %v252 = vunpack.c.l.b16 %v54
  %v253 = vunpack.c.h.b16 %v54
  %v254 = vunpack.c.l.b16 %v55
  %v255 = vunpack.c.h.b16 %v55
  %v256 = vunpack.c.l.b16 %v56
  %v257 = vunpack.c.h.b16 %v56
  %v258 = vunpack.c.l.b16 %v57
  %v259 = vunpack.c.h.b16 %v57
  %v260 = vunpack.c.l.b16 %v58
  %v261 = vunpack.c.h.b16 %v58
  %v262 = vunpack.c.l.b16 %v59
  %v263 = vunpack.c.h.b16 %v59
  %v264 = vunpack.c.l.b16 %v60
  %v265 = vunpack.c.h.b16 %v60
  %v266 = vunpack.c.l.b16 %v61
  %v267 = vunpack.c.h.b16 %v61
  %v268 = vunpack.c.l.b16 %v62
  %v269 = vunpack.c.h.b16 %v62
  %v270 = vunpack.c.l.b16 %v63
  %v271 = vunpack.c.h.b16 %v63
  %v272 = vunpack.c.l.b16 %v64
  %v273 = vunpack.c.h.b16 %v64
  %v274 = vunpack.c.l.b16 %v65
  %v275 = vunpack.c.h.b16 %v65
  %v276 = vunpack.c.l.b16 %v66
  %v277 = vunpack.c.h.b16 %v66
  %v278 = vunpack.c.l.b16 %v67
  %v279 = vunpack.c.h.b16 %v67
  %v280 = vunpack.c.l.b16 %v68
  %v281 = vunpack.c.h.b16 %v68
  %v282 = vunpack.c.l.b16 %v69
  %v283 = vunpack.c.h.b16 %v69
  %v284 = vunpack.c.l.b16 %v70
  %v285 = vunpack.c.h.b16 %v70
  %v286 = vunpack.c.l.b16 %v71
  %v287 = vunpack.c.h.b16 %v71
  %v288 = vunpack.c.l.b16 %v72
  %v289 = vunpack.c.h.b16 %v72
  %v290 = vunpack.c.l.b16 %v73
  %v291 = vunpack.c.h.b16 %v73
  %v292 = vunpack.c.l.b16 %v74
  %v293 = vunpack.c.h.b16 %v74
  %v294 = vunpack.c.l.b16 %v75
  %v295 = vunpack.c.h.b16 %v75
  %v296 = vunpack.c.l.b16 %v76
  %v297 = vunpack.c.h.b16 %v76
  %v298 = vunpack.c.l.b16 %v77
  %v299 = vunpack.c.h.b16 %v77
  %v300 = vunpack.c.l.b16 %v78
  %v301 = vunpack.c.h.b16 %v78
  %v302 = vunpack.c.l.b16 %v79
  %v303 = vunpack.c.h.b16 %v79
  %v304 = vunpack.c.l.b16 %v80
  %v305 = vunpack.c.h.b16 %v80
  %v306 = vunpack.c.l.b16 %v81
  %v307 = vunpack.c.h.b16 %v81
  %v308 = vunpack.c.l.b16 %v82
  %v309 = vunpack.c.h.b16 %v82
  %v310 = vunpack.c.l.b16 %v83
  %v311 = vunpack.c.h.b16 %v83
  %v312 = vunpack.c.l.b16 %v84
  %v313 = vunpack.c.h.b16 %v84
  %v314 = vunpack.c.l.b16 %v85
  %v315 = vunpack.c.h.b16 %v85
  %v316 = vunpack.c.l.b16 %v86
  %v317 = vunpack.c.h.b16 %v86
  %v318 = vunpack.c.l.b16 %v87
  %v319 = vunpack.c.h.b16 %v87
  %v320 = vunpack.c.l.b16 %v88
  %v321 = vunpack.c.h.b16 %v88
  %v322 = vunpack.c.l.b16 %v89
  %v323 = vunpack.c.h.b16 %v89
  %v324 = vunpack.c.l.b16 %v90
  %v325 = vunpack.c.h.b16 %v90
  %v326 = vunpack.c.l.b16 %v91
  %v327 = vunpack.c.h.b16 %v91
  %v328 = vunpack.c.l.b16 %v92
  %v329 = vunpack.c.h.b16 %v92
  %v330 = vunpack.c.l.b16 %v93
  %v331 = vunpack.c.h.b16 %v93
  %v332 = vunpack.c.l.b16 %v94
  %v333 = vunpack.c.h.b16 %v94
  %v334 = vunpack.c.l.b16 %v95
  %v335 = vunpack.c.h.b16 %v95
  %v336 = vpack.c.b16 %v192, %v176
  %v337 = vpack.c.b16 %v193, %v177
  %v338 = vpack.c.b16 %v194, %v178
  %v339 = vpack.c.b16 %v195, %v179
  %v340 = vpack.c.b16 %v196, %v180
  %v341 = vpack.c.b16 %v197, %v181
  %v342 = vpack.c.b16 %v198, %v182
  %v343 = vpack.c.b16 %v199, %v183
  %v344 = vpack.c.b16 %v200, %v184
  %v345 = vpack.c.b16 %v201, %v185
  %v346 = vpack.c.b16 %v202, %v186
  %v347 = vpack.c.b16 %v203, %v187
  %v348 = vpack.c.b16 %v204, %v188
  %v349 = vpack.c.b16 %v205, %v189
  %v350 = vpack.c.b16 %v206, %v190
  %v351 = vpack.c.b16 %v207, %v191
  %v352 = vpack.c.b16 %v224, %v208
  %v353 = vpack.c.b16 %v225, %v209
  %v354 = vpack.c.b16 %v226, %v210
  %v355 = vpack.c.b16 %v227, %v211
  %v356 = vpack.c.b16 %v228, %v212
  %v357 = vpack.c.b16 %v229, %v213
  %v358 = vpack.c.b16 %v230, %v214
  %v359 = vpack.c.b16 %v231, %v215
  %v360 = vpack.c.b16 %v232, %v216
  %v361 = vpack.c.b16 %v233, %v217
  %v362 = vpack.c.b16 %v234, %v218
  %v363 = vpack.c.b16 %v235, %v219
  %v364 = vpack.c.b16 %v236, %v220
  %v365 = vpack.c.b16 %v237, %v221
  %v366 = vpack.c.b16 %v238, %v222
  %v367 = vpack.c.b16 %v239, %v223
  %v368 = vpack.c.b16 %v256, %v240
  %v369 = vpack.c.b16 %v257, %v241
  %v370 = vpack.c.b16 %v258, %v242
  %v371 = vpack.c.b16 %v259, %v243
  %v372 = vpack.c.b16 %v260, %v244
  %v373 = vpack.c.b16 %v261, %v245
  %v374 = vpack.c.b16 %v262, %v246
  %v375 = vpack.c.b16 %v263, %v247
  %v376 = vpack.c.b16 %v264, %v248
  %v377 = vpack.c.b16 %v265, %v249
  %v378 = vpack.c.b16 %v266, %v250
  %v379 = vpack.c.b16 %v267, %v251
  %v380 = vpack.c.b16 %v268, %v252
  %v381 = vpack.c.b16 %v269, %v253
  %v382 = vpack.c.b16 %v270, %v254
  %v383 = vpack.c.b16 %v271, %v255
  %v384 = vpack.c.b16 %v288, %v272
  %v385 = vpack.c.b16 %v289, %v273
  %v386 = vpack.c.b16 %v290, %v274
  %v387 = vpack.c.b16 %v291, %v275
  %v388 = vpack.c.b16 %v292, %v276
  %v389 = vpack.c.b16 %v293, %v277
  %v390 = vpack.c.b16 %v294, %v278
  %v391 = vpack.c.b16 %v295, %v279
  %v392 = vpack.c.b16 %v296, %v280
  %v393 = vpack.c.b16 %v297, %v281
  %v394 = vpack.c.b16 %v298, %v282
  %v395 = vpack.c.b16 %v299, %v283
  %v396 = vpack.c.b16 %v300, %v284
  %v397 = vpack.c.b16 %v301, %v285
  %v398 = vpack.c.b16 %v302, %v286
  %v399 = vpack.c.b16 %v303, %v287
  %v400 = vpack.c.b16 %v320, %v304
  %v401 = vpack.c.b16 %v321, %v305
  %v402 = vpack.c.b16 %v322, %v306
  %v403 = vpack.c.b16 %v323, %v307
  %v404 = vpack.c.b16 %v324, %v308
  %v405 = vpack.c.b16 %v325, %v309
  %v406 = vpack.c.b16 %v326, %v310
  %v407 = vpack.c.b16 %v327, %v311
  %v408 = vpack.c.b16 %v328, %v312
  %v409 = vpack.c.b16 %v329, %v313
  %v410 = vpack.c.b16 %v330, %v314
  %v411 = vpack.c.b16 %v331, %v315
  %v412 = vpack.c.b16 %v332, %v316
  %v413 = vpack.c.b16 %v333, %v317
  %v414 = vpack.c.b16 %v334, %v318
  %v415 = vpack.c.b16 %v335, %v319
  %vm480 = vcmask 613376
  %v482 = vsel %vm480, %v15, 0
  %vm484 = vcmask 1044480
  %vm485 = vcmask 1045504
  %v486 = vsel %vm484, 4294967295, 65535
  %v487 = vsel %vm485, %v486, 0
  %v489 = vand.u32 %v400, %v487
  %v492 = vand.u32 %v401, %v487
  %v495 = vand.u32 %v402, %v487
  %v498 = vand.u32 %v403, %v487
  %v501 = vand.u32 %v404, %v487
  %v504 = vand.u32 %v405, %v487
  %v507 = vand.u32 %v406, %v487
  %v510 = vand.u32 %v407, %v487
  %v513 = vand.u32 %v408, %v487
  %v516 = vand.u32 %v409, %v487
  %v519 = vand.u32 %v410, %v487
  %v522 = vand.u32 %v411, %v487
  %v525 = vand.u32 %v412, %v487
  %v528 = vand.u32 %v413, %v487
  %v531 = vand.u32 %v414, %v487
  %v534 = vand.u32 %v415, %v487
  %536 = vmatprep.subr.bf16.mxu0 %v337
  %537 = vmatpush1.bf16.msra.mxu0 %v336
  %538 = vmatprep.subr.bf16.mxu0 %v353
  %539 = vmatpush1.bf16.msra.mxu0 %v352
  %540 = vmatprep.subr.bf16.mxu0 %v369
  %541 = vmatpush1.bf16.msra.mxu0 %v368
  %542 = vmatprep.subr.bf16.mxu0 %v385
  %543 = vmatpush1.bf16.msra.mxu0 %v384
  %544 = vmatprep.subr.bf16.mxu0 %v492
  %545 = vmatpush1.bf16.msra.mxu0 %v489
  %546 = vmatprep.subr.bf16.mxu0 0
  %547 = vmatpush1.bf16.msra.mxu0 0
  %548 = vmatprep.subr.bf16.mxu0 0
  %549 = vmatpush1.bf16.msra.mxu0 0
  %550 = vmatprep.subr.bf16.mxu0 0
  %551 = vmatpush1.bf16.msra.mxu0 0
  %552 = vmatprep.subr.bf16.mxu0 0
  %553 = vmatpush1.bf16.msra.mxu0 0
  %554 = vmatprep.subr.bf16.mxu0 0
  %555 = vmatpush1.bf16.msra.mxu0 0
  %556 = vmatprep.subr.bf16.mxu0 0
  %557 = vmatpush1.bf16.msra.mxu0 0
  %558 = vmatprep.subr.bf16.mxu0 0
  %559 = vmatpush1.bf16.msra.mxu0 0
  %560 = vmatprep.subr.bf16.mxu0 0
  %561 = vmatpush1.bf16.msra.mxu0 0
  %562 = vmatprep.subr.bf16.mxu0 0
  %563 = vmatpush1.bf16.msra.mxu0 0
  %564 = vmatprep.subr.bf16.mxu0 0
  %565 = vmatpush1.bf16.msra.mxu0 0
  %566 = vmatprep.subr.bf16.mxu0 0
  %567 = vmatpush1.bf16.msra.mxu0 0
  %568 = vmatprep.mubr.bf16.mxu0 0
  %569 = vmatmul.mubr.bf16.gmra.mrb[0].mxu0 %v482
  %v570 = vpop.f32.mrb[0].mxu0
  %v571 = vadd.f32 0.0, %v570
  %v572 = vpop.f32.mrb[0].mxu0
  %v573 = vadd.f32 0.0, %v572
  %v574 = vpop.f32.mrb[0].mxu0
  %v575 = vpop.f32.mrb[0].mxu0
  %576 = vdwg.mxu0
  %577 = vmatprep.subr.bf16.mxu0 %v339
  %578 = vmatpush1.bf16.msra.mxu0 %v338
  %579 = vmatprep.subr.bf16.mxu0 %v355
  %580 = vmatpush1.bf16.msra.mxu0 %v354
  %581 = vmatprep.subr.bf16.mxu0 %v371
  %582 = vmatpush1.bf16.msra.mxu0 %v370
  %583 = vmatprep.subr.bf16.mxu0 %v387
  %584 = vmatpush1.bf16.msra.mxu0 %v386
  %585 = vmatprep.subr.bf16.mxu0 %v498
  %586 = vmatpush1.bf16.msra.mxu0 %v495
  %587 = vmatprep.subr.bf16.mxu0 0
  %588 = vmatpush1.bf16.msra.mxu0 0
  %589 = vmatprep.subr.bf16.mxu0 0
  %590 = vmatpush1.bf16.msra.mxu0 0
  %591 = vmatprep.subr.bf16.mxu0 0
  %592 = vmatpush1.bf16.msra.mxu0 0
  %593 = vmatprep.subr.bf16.mxu0 0
  %594 = vmatpush1.bf16.msra.mxu0 0
  %595 = vmatprep.subr.bf16.mxu0 0
  %596 = vmatpush1.bf16.msra.mxu0 0
  %597 = vmatprep.subr.bf16.mxu0 0
  %598 = vmatpush1.bf16.msra.mxu0 0
  %599 = vmatprep.subr.bf16.mxu0 0
  %600 = vmatpush1.bf16.msra.mxu0 0
  %601 = vmatprep.subr.bf16.mxu0 0
  %602 = vmatpush1.bf16.msra.mxu0 0
  %603 = vmatprep.subr.bf16.mxu0 0
  %604 = vmatpush1.bf16.msra.mxu0 0
  %605 = vmatprep.subr.bf16.mxu0 0
  %606 = vmatpush1.bf16.msra.mxu0 0
  %607 = vmatprep.subr.bf16.mxu0 0
  %608 = vmatpush1.bf16.msra.mxu0 0
  %609 = vmatprep.mubr.bf16.mxu0 0
  %610 = vmatmul.mubr.bf16.gmra.mrb[0].mxu0 %v482
  %v611 = vpop.f32.mrb[0].mxu0
  %v612 = vadd.f32 0.0, %v611
  %v613 = vpop.f32.mrb[0].mxu0
  %v614 = vadd.f32 0.0, %v613
  %v615 = vpop.f32.mrb[0].mxu0
  %v616 = vpop.f32.mrb[0].mxu0
  %617 = vdwg.mxu0
  %618 = vmatprep.subr.bf16.mxu0 %v341
  %619 = vmatpush1.bf16.msra.mxu0 %v340
  %620 = vmatprep.subr.bf16.mxu0 %v357
  %621 = vmatpush1.bf16.msra.mxu0 %v356
  %622 = vmatprep.subr.bf16.mxu0 %v373
  %623 = vmatpush1.bf16.msra.mxu0 %v372
  %624 = vmatprep.subr.bf16.mxu0 %v389
  %625 = vmatpush1.bf16.msra.mxu0 %v388
  %626 = vmatprep.subr.bf16.mxu0 %v504
  %627 = vmatpush1.bf16.msra.mxu0 %v501
  %628 = vmatprep.subr.bf16.mxu0 0
  %629 = vmatpush1.bf16.msra.mxu0 0
  %630 = vmatprep.subr.bf16.mxu0 0
  %631 = vmatpush1.bf16.msra.mxu0 0
  %632 = vmatprep.subr.bf16.mxu0 0
  %633 = vmatpush1.bf16.msra.mxu0 0
  %634 = vmatprep.subr.bf16.mxu0 0
  %635 = vmatpush1.bf16.msra.mxu0 0
  %636 = vmatprep.subr.bf16.mxu0 0
  %637 = vmatpush1.bf16.msra.mxu0 0
  %638 = vmatprep.subr.bf16.mxu0 0
  %639 = vmatpush1.bf16.msra.mxu0 0
  %640 = vmatprep.subr.bf16.mxu0 0
  %641 = vmatpush1.bf16.msra.mxu0 0
  %642 = vmatprep.subr.bf16.mxu0 0
  %643 = vmatpush1.bf16.msra.mxu0 0
  %644 = vmatprep.subr.bf16.mxu0 0
  %645 = vmatpush1.bf16.msra.mxu0 0
  %646 = vmatprep.subr.bf16.mxu0 0
  %647 = vmatpush1.bf16.msra.mxu0 0
  %648 = vmatprep.subr.bf16.mxu0 0
  %649 = vmatpush1.bf16.msra.mxu0 0
  %650 = vmatprep.mubr.bf16.mxu0 0
  %651 = vmatmul.mubr.bf16.gmra.mrb[0].mxu0 %v482
  %v652 = vpop.f32.mrb[0].mxu0
  %v653 = vadd.f32 0.0, %v652
  %v654 = vpop.f32.mrb[0].mxu0
  %v655 = vadd.f32 0.0, %v654
  %v656 = vpop.f32.mrb[0].mxu0
  %v657 = vpop.f32.mrb[0].mxu0
  %658 = vdwg.mxu0
  %659 = vmatprep.subr.bf16.mxu0 %v343
  %660 = vmatpush1.bf16.msra.mxu0 %v342
  %661 = vmatprep.subr.bf16.mxu0 %v359
  %662 = vmatpush1.bf16.msra.mxu0 %v358
  %663 = vmatprep.subr.bf16.mxu0 %v375
  %664 = vmatpush1.bf16.msra.mxu0 %v374
  %665 = vmatprep.subr.bf16.mxu0 %v391
  %666 = vmatpush1.bf16.msra.mxu0 %v390
  %667 = vmatprep.subr.bf16.mxu0 %v510
  %668 = vmatpush1.bf16.msra.mxu0 %v507
  %669 = vmatprep.subr.bf16.mxu0 0
  %670 = vmatpush1.bf16.msra.mxu0 0
  %671 = vmatprep.subr.bf16.mxu0 0
  %672 = vmatpush1.bf16.msra.mxu0 0
  %673 = vmatprep.subr.bf16.mxu0 0
  %674 = vmatpush1.bf16.msra.mxu0 0
  %675 = vmatprep.subr.bf16.mxu0 0
  %676 = vmatpush1.bf16.msra.mxu0 0
  %677 = vmatprep.subr.bf16.mxu0 0
  %678 = vmatpush1.bf16.msra.mxu0 0
  %679 = vmatprep.subr.bf16.mxu0 0
  %680 = vmatpush1.bf16.msra.mxu0 0
  %681 = vmatprep.subr.bf16.mxu0 0
  %682 = vmatpush1.bf16.msra.mxu0 0
  %683 = vmatprep.subr.bf16.mxu0 0
  %684 = vmatpush1.bf16.msra.mxu0 0
  %685 = vmatprep.subr.bf16.mxu0 0
  %686 = vmatpush1.bf16.msra.mxu0 0
  %687 = vmatprep.subr.bf16.mxu0 0
  %688 = vmatpush1.bf16.msra.mxu0 0
  %689 = vmatprep.subr.bf16.mxu0 0
  %690 = vmatpush1.bf16.msra.mxu0 0
  %691 = vmatprep.mubr.bf16.mxu0 0
  %692 = vmatmul.mubr.bf16.gmra.mrb[0].mxu0 %v482
  %v693 = vpop.f32.mrb[0].mxu0
  %v694 = vadd.f32 0.0, %v693
  %v695 = vpop.f32.mrb[0].mxu0
  %v696 = vadd.f32 0.0, %v695
  %v697 = vpop.f32.mrb[0].mxu0
  %v698 = vpop.f32.mrb[0].mxu0
  %699 = vdwg.mxu0
  %700 = vmatprep.subr.bf16.mxu0 %v345
  %701 = vmatpush1.bf16.msra.mxu0 %v344
  %702 = vmatprep.subr.bf16.mxu0 %v361
  %703 = vmatpush1.bf16.msra.mxu0 %v360
  %704 = vmatprep.subr.bf16.mxu0 %v377
  %705 = vmatpush1.bf16.msra.mxu0 %v376
  %706 = vmatprep.subr.bf16.mxu0 %v393
  %707 = vmatpush1.bf16.msra.mxu0 %v392
  %708 = vmatprep.subr.bf16.mxu0 %v516
  %709 = vmatpush1.bf16.msra.mxu0 %v513
  %710 = vmatprep.subr.bf16.mxu0 0
  %711 = vmatpush1.bf16.msra.mxu0 0
  %712 = vmatprep.subr.bf16.mxu0 0
  %713 = vmatpush1.bf16.msra.mxu0 0
  %714 = vmatprep.subr.bf16.mxu0 0
  %715 = vmatpush1.bf16.msra.mxu0 0
  %716 = vmatprep.subr.bf16.mxu0 0
  %717 = vmatpush1.bf16.msra.mxu0 0
  %718 = vmatprep.subr.bf16.mxu0 0
  %719 = vmatpush1.bf16.msra.mxu0 0
  %720 = vmatprep.subr.bf16.mxu0 0
  %721 = vmatpush1.bf16.msra.mxu0 0
  %722 = vmatprep.subr.bf16.mxu0 0
  %723 = vmatpush1.bf16.msra.mxu0 0
  %724 = vmatprep.subr.bf16.mxu0 0
  %725 = vmatpush1.bf16.msra.mxu0 0
  %726 = vmatprep.subr.bf16.mxu0 0
  %727 = vmatpush1.bf16.msra.mxu0 0
  %728 = vmatprep.subr.bf16.mxu0 0
  %729 = vmatpush1.bf16.msra.mxu0 0
  %730 = vmatprep.subr.bf16.mxu0 0
  %731 = vmatpush1.bf16.msra.mxu0 0
  %732 = vmatprep.mubr.bf16.mxu0 0
  %733 = vmatmul.mubr.bf16.gmra.mrb[0].mxu0 %v482
  %v734 = vpop.f32.mrb[0].mxu0
  %v735 = vadd.f32 0.0, %v734
  %v736 = vpop.f32.mrb[0].mxu0
  %v737 = vadd.f32 0.0, %v736
  %v738 = vpop.f32.mrb[0].mxu0
  %v739 = vpop.f32.mrb[0].mxu0
  %740 = vdwg.mxu0
  %741 = vmatprep.subr.bf16.mxu0 %v347
  %742 = vmatpush1.bf16.msra.mxu0 %v346
  %743 = vmatprep.subr.bf16.mxu0 %v363
  %744 = vmatpush1.bf16.msra.mxu0 %v362
  %745 = vmatprep.subr.bf16.mxu0 %v379
  %746 = vmatpush1.bf16.msra.mxu0 %v378
  %747 = vmatprep.subr.bf16.mxu0 %v395
  %748 = vmatpush1.bf16.msra.mxu0 %v394
  %749 = vmatprep.subr.bf16.mxu0 %v522
  %750 = vmatpush1.bf16.msra.mxu0 %v519
  %751 = vmatprep.subr.bf16.mxu0 0
  %752 = vmatpush1.bf16.msra.mxu0 0
  %753 = vmatprep.subr.bf16.mxu0 0
  %754 = vmatpush1.bf16.msra.mxu0 0
  %755 = vmatprep.subr.bf16.mxu0 0
  %756 = vmatpush1.bf16.msra.mxu0 0
  %757 = vmatprep.subr.bf16.mxu0 0
  %758 = vmatpush1.bf16.msra.mxu0 0
  %759 = vmatprep.subr.bf16.mxu0 0
  %760 = vmatpush1.bf16.msra.mxu0 0
  %761 = vmatprep.subr.bf16.mxu0 0
  %762 = vmatpush1.bf16.msra.mxu0 0
  %763 = vmatprep.subr.bf16.mxu0 0
  %764 = vmatpush1.bf16.msra.mxu0 0
  %765 = vmatprep.subr.bf16.mxu0 0
  %766 = vmatpush1.bf16.msra.mxu0 0
  %767 = vmatprep.subr.bf16.mxu0 0
  %768 = vmatpush1.bf16.msra.mxu0 0
  %769 = vmatprep.subr.bf16.mxu0 0
  %770 = vmatpush1.bf16.msra.mxu0 0
  %771 = vmatprep.subr.bf16.mxu0 0
  %772 = vmatpush1.bf16.msra.mxu0 0
  %773 = vmatprep.mubr.bf16.mxu0 0
  %774 = vmatmul.mubr.bf16.gmra.mrb[0].mxu0 %v482
  %v775 = vpop.f32.mrb[0].mxu0
  %v776 = vadd.f32 0.0, %v775
  %v777 = vpop.f32.mrb[0].mxu0
  %v778 = vadd.f32 0.0, %v777
  %v779 = vpop.f32.mrb[0].mxu0
  %v780 = vpop.f32.mrb[0].mxu0
  %781 = vdwg.mxu0
  %782 = vmatprep.subr.bf16.mxu0 %v349
  %783 = vmatpush1.bf16.msra.mxu0 %v348
  %784 = vmatprep.subr.bf16.mxu0 %v365
  %785 = vmatpush1.bf16.msra.mxu0 %v364
  %786 = vmatprep.subr.bf16.mxu0 %v381
  %787 = vmatpush1.bf16.msra.mxu0 %v380
  %788 = vmatprep.subr.bf16.mxu0 %v397
  %789 = vmatpush1.bf16.msra.mxu0 %v396
  %790 = vmatprep.subr.bf16.mxu0 %v528
  %791 = vmatpush1.bf16.msra.mxu0 %v525
  %792 = vmatprep.subr.bf16.mxu0 0
  %793 = vmatpush1.bf16.msra.mxu0 0
  %794 = vmatprep.subr.bf16.mxu0 0
  %795 = vmatpush1.bf16.msra.mxu0 0
  %796 = vmatprep.subr.bf16.mxu0 0
  %797 = vmatpush1.bf16.msra.mxu0 0
  %798 = vmatprep.subr.bf16.mxu0 0
  %799 = vmatpush1.bf16.msra.mxu0 0
  %800 = vmatprep.subr.bf16.mxu0 0
  %801 = vmatpush1.bf16.msra.mxu0 0
  %802 = vmatprep.subr.bf16.mxu0 0
  %803 = vmatpush1.bf16.msra.mxu0 0
  %804 = vmatprep.subr.bf16.mxu0 0
  %805 = vmatpush1.bf16.msra.mxu0 0
  %806 = vmatprep.subr.bf16.mxu0 0
  %807 = vmatpush1.bf16.msra.mxu0 0
  %808 = vmatprep.subr.bf16.mxu0 0
  %809 = vmatpush1.bf16.msra.mxu0 0
  %810 = vmatprep.subr.bf16.mxu0 0
  %811 = vmatpush1.bf16.msra.mxu0 0
  %812 = vmatprep.subr.bf16.mxu0 0
  %813 = vmatpush1.bf16.msra.mxu0 0
  %814 = vmatprep.mubr.bf16.mxu0 0
  %815 = vmatmul.mubr.bf16.gmra.mrb[0].mxu0 %v482
  %v816 = vpop.f32.mrb[0].mxu0
  %v817 = vadd.f32 0.0, %v816
  %v818 = vpop.f32.mrb[0].mxu0
  %v819 = vadd.f32 0.0, %v818
  %v820 = vpop.f32.mrb[0].mxu0
  %v821 = vpop.f32.mrb[0].mxu0
  %822 = vdwg.mxu0
  %823 = vmatprep.subr.bf16.mxu0 %v351
  %824 = vmatpush1.bf16.msra.mxu0 %v350
  %825 = vmatprep.subr.bf16.mxu0 %v367
  %826 = vmatpush1.bf16.msra.mxu0 %v366
  %827 = vmatprep.subr.bf16.mxu0 %v383
  %828 = vmatpush1.bf16.msra.mxu0 %v382
  %829 = vmatprep.subr.bf16.mxu0 %v399
  %830 = vmatpush1.bf16.msra.mxu0 %v398
  %831 = vmatprep.subr.bf16.mxu0 %v534
  %832 = vmatpush1.bf16.msra.mxu0 %v531
  %833 = vmatprep.subr.bf16.mxu0 0
  %834 = vmatpush1.bf16.msra.mxu0 0
  %835 = vmatprep.subr.bf16.mxu0 0
  %836 = vmatpush1.bf16.msra.mxu0 0
  %837 = vmatprep.subr.bf16.mxu0 0
  %838 = vmatpush1.bf16.msra.mxu0 0
  %839 = vmatprep.subr.bf16.mxu0 0
  %840 = vmatpush1.bf16.msra.mxu0 0
  %841 = vmatprep.subr.bf16.mxu0 0
  %842 = vmatpush1.bf16.msra.mxu0 0
  %843 = vmatprep.subr.bf16.mxu0 0
  %844 = vmatpush1.bf16.msra.mxu0 0
  %845 = vmatprep.subr.bf16.mxu0 0
  %846 = vmatpush1.bf16.msra.mxu0 0
  %847 = vmatprep.subr.bf16.mxu0 0
  %848 = vmatpush1.bf16.msra.mxu0 0
  %849 = vmatprep.subr.bf16.mxu0 0
  %850 = vmatpush1.bf16.msra.mxu0 0
  %851 = vmatprep.subr.bf16.mxu0 0
  %852 = vmatpush1.bf16.msra.mxu0 0
  %853 = vmatprep.subr.bf16.mxu0 0
  %854 = vmatpush1.bf16.msra.mxu0 0
  %855 = vmatprep.mubr.bf16.mxu0 0
  %856 = vmatmul.mubr.bf16.gmra.mrb[0].mxu0 %v482
  %v857 = vpop.f32.mrb[0].mxu0
  %v858 = vadd.f32 0.0, %v857
  %v859 = vpop.f32.mrb[0].mxu0
  %v860 = vadd.f32 0.0, %v859
  %v861 = vpop.f32.mrb[0].mxu0
  %v862 = vpop.f32.mrb[0].mxu0
  %863 = vdwg.mxu0
  %v864 = vmax.f32 %v571, %v653
  %v865 = vmax.f32 %v573, %v655
  %v866 = vmax.f32 %v612, %v694
  %v867 = vmax.f32 %v614, %v696
  %v868 = vmax.f32 %v735, %v817
  %v869 = vmax.f32 %v737, %v819
  %v870 = vmax.f32 %v776, %v858
  %v871 = vmax.f32 %v778, %v860
  %v872 = vmax.f32 %v864, %v868
  %v873 = vmax.f32 %v865, %v869
  %v874 = vmax.f32 %v866, %v870
  %v875 = vmax.f32 %v867, %v871
  %v876 = vld [vmem:[%s1] sm:$0x3f]
  %878 = vset.pattern.permute.xlu0 0
  %879 = vperm.xlu0 %878, %v876
  %v880 = vpop.permute.xlu0 %879
  %v882 = vadd.f32 %v872, %v880
  %v883 = vadd.f32 %v873, %v880
  %v884 = vadd.f32 %v874, %v880
  %v885 = vadd.f32 %v875, %v880
  %v886 = vmax.f32 %v882, 0.0
  %v887 = vmax.f32 %v883, 0.0
  %v888 = vmax.f32 %v884, 0.0
  %v889 = vmax.f32 %v885, 0.0
  %890 = vst [vmem:[%s3] sm:$0x3f] %v886
  %891 = vst [vmem:[%s3 + $0x8] sm:$0x3f] %v887
  %892 = vst [vmem:[%s3 + $0x10] sm:$0x3f] %v888
  %893 = vst [vmem:[%s3 + $0x18] sm:$0x3f] %v889
  // Predicated region
  $region14: #{lenet_adv_forward.3} parent=0 // pred_check
    _
  $region15: #{lenet_adv_forward.3} parent=0 // pred_check_branch
    %895 = sbr.rel (0) target = $region17
  $region16: #{lenet_adv_forward.3} parent=0 // pred_region
    _
  $region17: #{lenet_adv_forward.3} parent=0 // pred_fallthru
    _
  // Predicated region
  $region18: #{lenet_adv_forward.3} parent=0 // pred_check
    _
  $region19: #{lenet_adv_forward.3} parent=0 // pred_check_branch
    %897 = sbr.rel (0) target = $region21
  $region20: #{lenet_adv_forward.3} parent=0 // pred_region
    _
  $region21: #{lenet_adv_forward.3} parent=0 // pred_fallthru
    _

// kernel: lenet_adv_forward.4
$region0: #{lenet_adv_forward.4}
  #allocation0 [shape = 'u32[]', space=smem, size = 0x4, offset = 0x4, fixed_abs, tag = 'smem constant byte address 0x4 - core index']
  #allocation1 [shape = 'u32[144,128]{1,0:T(1,128)}', space=vmem, size = 0x12000, scoped, tag = 'internal scratch']
  %s0 = inlined_call_operand.vmem [shape: bf16[16,150], index: 0, kind: input, shape index: {}]
  %s1 = inlined_call_operand.vmem [shape: f32[16,1], index: 1, kind: input, shape index: {}]
  %s2 = inlined_call_operand.vmem [shape: bf16[150,512], index: 2, kind: input, shape index: {}]
  %s3 = inlined_call_operand.vmem [shape: f32[16,128], index: 3, kind: output, shape index: {}]
  %s4 = sld [smem:[#allocation0]]
  $region22: #{lenet_adv_forward.4} parent=0
    _
  %s6 = ssub.s32 1, %s4
  %s7 = scalar_select 0, %s6, %s4
  // Predicated region
  $region2: #{lenet_adv_forward.4} parent=0 // pred_check
    _
  $region3: #{lenet_adv_forward.4} parent=0 // pred_check_branch
    %9 = sbr.rel (0) target = $region5
  $region4: #{lenet_adv_forward.4} parent=0 // pred_region
    _
  $region5: #{lenet_adv_forward.4} parent=0 // pred_fallthru
    _
  // Predicated region
  $region6: #{lenet_adv_forward.4} parent=0 // pred_check
    _
  $region7: #{lenet_adv_forward.4} parent=0 // pred_check_branch
    %11 = sbr.rel (0) target = $region9
  $region8: #{lenet_adv_forward.4} parent=0 // pred_region
    _
  $region9: #{lenet_adv_forward.4} parent=0 // pred_fallthru
    _
  // Predicated region
  $region10: #{lenet_adv_forward.4} parent=0 // pred_check
    _
  $region11: #{lenet_adv_forward.4} parent=0 // pred_check_branch
    %13 = sbr.rel (0) target = $region13
  $region12: #{lenet_adv_forward.4} parent=0 // pred_region
    _
  $region13: #{lenet_adv_forward.4} parent=0 // pred_fallthru
    _
  %v15 = vld [vmem:[%s0] sm:$0xff]
  %v16 = vld [vmem:[%s0 + $0x8] sm:$0xff]
  %v17 = vld [vmem:[%s2] sm:$0xff]
  %v18 = vld [vmem:[%s2 + $0x8] sm:$0xff]
  %v19 = vld [vmem:[%s2 + $0x10] sm:$0xff]
  %v20 = vld [vmem:[%s2 + $0x18] sm:$0xff]
  %v21 = vld [vmem:[%s2 + $0x20] sm:$0xff]
  %v22 = vld [vmem:[%s2 + $0x28] sm:$0xff]
  %v23 = vld [vmem:[%s2 + $0x30] sm:$0xff]
  %v24 = vld [vmem:[%s2 + $0x38] sm:$0xff]
  %v25 = vld [vmem:[%s2 + $0x40] sm:$0xff]
  %v26 = vld [vmem:[%s2 + $0x48] sm:$0xff]
  %v27 = vld [vmem:[%s2 + $0x50] sm:$0xff]
  %v28 = vld [vmem:[%s2 + $0x58] sm:$0xff]
  %v29 = vld [vmem:[%s2 + $0x60] sm:$0xff]
  %v30 = vld [vmem:[%s2 + $0x68] sm:$0xff]
  %v31 = vld [vmem:[%s2 + $0x70] sm:$0xff]
  %v32 = vld [vmem:[%s2 + $0x78] sm:$0xff]
  %v33 = vld [vmem:[%s2 + $0x80] sm:$0xff]
  %v34 = vld [vmem:[%s2 + $0x88] sm:$0xff]
  %v35 = vld [vmem:[%s2 + $0x90] sm:$0xff]
  %v36 = vld [vmem:[%s2 + $0x98] sm:$0xff]
  %v37 = vld [vmem:[%s2 + $0xa0] sm:$0xff]
  %v38 = vld [vmem:[%s2 + $0xa8] sm:$0xff]
  %v39 = vld [vmem:[%s2 + $0xb0] sm:$0xff]
  %v40 = vld [vmem:[%s2 + $0xb8] sm:$0xff]
  %v41 = vld [vmem:[%s2 + $0xc0] sm:$0xff]
  %v42 = vld [vmem:[%s2 + $0xc8] sm:$0xff]
  %v43 = vld [vmem:[%s2 + $0xd0] sm:$0xff]
  %v44 = vld [vmem:[%s2 + $0xd8] sm:$0xff]
  %v45 = vld [vmem:[%s2 + $0xe0] sm:$0xff]
  %v46 = vld [vmem:[%s2 + $0xe8] sm:$0xff]
  %v47 = vld [vmem:[%s2 + $0xf0] sm:$0xff]
  %v48 = vld [vmem:[%s2 + $0xf8] sm:$0xff]
  %v49 = vld [vmem:[%s2 + $0x100] sm:$0xff]
  %v50 = vld [vmem:[%s2 + $0x108] sm:$0xff]
  %v51 = vld [vmem:[%s2 + $0x110] sm:$0xff]
  %v52 = vld [vmem:[%s2 + $0x118] sm:$0xff]
  %v53 = vld [vmem:[%s2 + $0x120] sm:$0x77]
  %v54 = vld [vmem:[%s2 + $0x128] sm:$0x77]
  %v57 = vunpack.c.l.b16 %v15
  %v58 = vunpack.c.h.b16 %v15
  %v59 = vunpack.c.l.b16 %v16
  %v60 = vunpack.c.h.b16 %v16
  %v61 = vpack.c.b16 %v59, %v57
  %v62 = vpack.c.b16 %v60, %v58
  %v102 = vunpack.c.l.b16 %v17
  %v103 = vunpack.c.h.b16 %v17
  %v104 = vunpack.c.l.b16 %v18
  %v105 = vunpack.c.h.b16 %v18
  %v106 = vunpack.c.l.b16 %v19
  %v107 = vunpack.c.h.b16 %v19
  %v108 = vunpack.c.l.b16 %v20
  %v109 = vunpack.c.h.b16 %v20
  %v110 = vunpack.c.l.b16 %v21
  %v111 = vunpack.c.h.b16 %v21
  %v112 = vunpack.c.l.b16 %v22
  %v113 = vunpack.c.h.b16 %v22
  %v114 = vunpack.c.l.b16 %v23
  %v115 = vunpack.c.h.b16 %v23
  %v116 = vunpack.c.l.b16 %v24
  %v117 = vunpack.c.h.b16 %v24
  %v118 = vunpack.c.l.b16 %v25
  %v119 = vunpack.c.h.b16 %v25
  %v120 = vunpack.c.l.b16 %v26
  %v121 = vunpack.c.h.b16 %v26
  %v122 = vunpack.c.l.b16 %v27
  %v123 = vunpack.c.h.b16 %v27
  %v124 = vunpack.c.l.b16 %v28
  %v125 = vunpack.c.h.b16 %v28
  %v126 = vunpack.c.l.b16 %v29
  %v127 = vunpack.c.h.b16 %v29
  %v128 = vunpack.c.l.b16 %v30
  %v129 = vunpack.c.h.b16 %v30
  %v130 = vunpack.c.l.b16 %v31
  %v131 = vunpack.c.h.b16 %v31
  %v132 = vunpack.c.l.b16 %v32
  %v133 = vunpack.c.h.b16 %v32
  %v134 = vunpack.c.l.b16 %v33
  %v135 = vunpack.c.h.b16 %v33
  %v136 = vunpack.c.l.b16 %v34
  %v137 = vunpack.c.h.b16 %v34
  %v138 = vunpack.c.l.b16 %v35
  %v139 = vunpack.c.h.b16 %v35
  %v140 = vunpack.c.l.b16 %v36
  %v141 = vunpack.c.h.b16 %v36
  %v142 = vunpack.c.l.b16 %v37
  %v143 = vunpack.c.h.b16 %v37
  %v144 = vunpack.c.l.b16 %v38
  %v145 = vunpack.c.h.b16 %v38
  %v146 = vunpack.c.l.b16 %v39
  %v147 = vunpack.c.h.b16 %v39
  %v148 = vunpack.c.l.b16 %v40
  %v149 = vunpack.c.h.b16 %v40
  %v150 = vunpack.c.l.b16 %v41
  %v151 = vunpack.c.h.b16 %v41
  %v152 = vunpack.c.l.b16 %v42
  %v153 = vunpack.c.h.b16 %v42
  %v154 = vunpack.c.l.b16 %v43
  %v155 = vunpack.c.h.b16 %v43
  %v156 = vunpack.c.l.b16 %v44
  %v157 = vunpack.c.h.b16 %v44
  %v158 = vunpack.c.l.b16 %v45
  %v159 = vunpack.c.h.b16 %v45
  %v160 = vunpack.c.l.b16 %v46
  %v161 = vunpack.c.h.b16 %v46
  %v162 = vunpack.c.l.b16 %v47
  %v163 = vunpack.c.h.b16 %v47
  %v164 = vunpack.c.l.b16 %v48
  %v165 = vunpack.c.h.b16 %v48
  %v166 = vunpack.c.l.b16 %v49
  %v167 = vunpack.c.h.b16 %v49
  %v168 = vunpack.c.l.b16 %v50
  %v169 = vunpack.c.h.b16 %v50
  %v170 = vunpack.c.l.b16 %v51
  %v171 = vunpack.c.h.b16 %v51
  %v172 = vunpack.c.l.b16 %v52
  %v173 = vunpack.c.h.b16 %v52
  %v174 = vunpack.c.l.b16 %v53
  %v175 = vunpack.c.h.b16 %v53
  %v176 = vunpack.c.l.b16 %v54
  %v177 = vunpack.c.h.b16 %v54
  %v178 = vpack.c.b16 %v106, %v102
  %v179 = vpack.c.b16 %v107, %v103
  %v180 = vpack.c.b16 %v108, %v104
  %v181 = vpack.c.b16 %v109, %v105
  %v182 = vpack.c.b16 %v114, %v110
  %v183 = vpack.c.b16 %v115, %v111
  %v184 = vpack.c.b16 %v116, %v112
  %v185 = vpack.c.b16 %v117, %v113
  %v186 = vpack.c.b16 %v122, %v118
  %v187 = vpack.c.b16 %v123, %v119
  %v188 = vpack.c.b16 %v124, %v120
  %v189 = vpack.c.b16 %v125, %v121
  %v190 = vpack.c.b16 %v130, %v126
  %v191 = vpack.c.b16 %v131, %v127
  %v192 = vpack.c.b16 %v132, %v128
  %v193 = vpack.c.b16 %v133, %v129
  %v194 = vpack.c.b16 %v138, %v134
  %v195 = vpack.c.b16 %v139, %v135
  %v196 = vpack.c.b16 %v140, %v136
  %v197 = vpack.c.b16 %v141, %v137
  %v198 = vpack.c.b16 %v146, %v142
  %v199 = vpack.c.b16 %v147, %v143
  %v200 = vpack.c.b16 %v148, %v144
  %v201 = vpack.c.b16 %v149, %v145
  %v202 = vpack.c.b16 %v154, %v150
  %v203 = vpack.c.b16 %v155, %v151
  %v204 = vpack.c.b16 %v156, %v152
  %v205 = vpack.c.b16 %v157, %v153
  %v206 = vpack.c.b16 %v162, %v158
  %v207 = vpack.c.b16 %v163, %v159
  %v208 = vpack.c.b16 %v164, %v160
  %v209 = vpack.c.b16 %v165, %v161
  %v210 = vpack.c.b16 %v170, %v166
  %v211 = vpack.c.b16 %v171, %v167
  %v212 = vpack.c.b16 %v172, %v168
  %v213 = vpack.c.b16 %v173, %v169
  %v214 = vpack.c.b16 %v174, %v174
  %v215 = vpack.c.b16 %v175, %v175
  %v216 = vpack.c.b16 %v176, %v176
  %v217 = vpack.c.b16 %v177, %v177
  %vm254 = vcmask 179200
  %v256 = vsel %vm254, %v62, 0
  %vm258 = vcmask 1042432
  %v260 = vsel %vm258, %v214, 0
  %v263 = vsel %vm258, %v215, 0
  %v266 = vsel %vm258, %v216, 0
  %v269 = vsel %vm258, %v217, 0
  %271 = vmatprep.subr.bf16.mxu0 %v179
  %272 = vmatpush1.bf16.msra.mxu0 %v178
  %273 = vmatprep.subr.bf16.mxu0 %v183
  %274 = vmatpush1.bf16.msra.mxu0 %v182
  %275 = vmatprep.subr.bf16.mxu0 %v187
  %276 = vmatpush1.bf16.msra.mxu0 %v186
  %277 = vmatprep.subr.bf16.mxu0 %v191
  %278 = vmatpush1.bf16.msra.mxu0 %v190
  %279 = vmatprep.subr.bf16.mxu0 %v195
  %280 = vmatpush1.bf16.msra.mxu0 %v194
  %281 = vmatprep.subr.bf16.mxu0 %v199
  %282 = vmatpush1.bf16.msra.mxu0 %v198
  %283 = vmatprep.subr.bf16.mxu0 %v203
  %284 = vmatpush1.bf16.msra.mxu0 %v202
  %285 = vmatprep.subr.bf16.mxu0 %v207
  %286 = vmatpush1.bf16.msra.mxu0 %v206
  %287 = vmatprep.subr.bf16.mxu0 %v211
  %288 = vmatpush1.bf16.msra.mxu0 %v210
  %289 = vmatprep.subr.bf16.mxu0 %v263
  %290 = vmatpush1.bf16.msra.mxu0 %v260
  %291 = vmatprep.subr.bf16.mxu0 0
  %292 = vmatpush1.bf16.msra.mxu0 0
  %293 = vmatprep.subr.bf16.mxu0 0
  %294 = vmatpush1.bf16.msra.mxu0 0
  %295 = vmatprep.subr.bf16.mxu0 0
  %296 = vmatpush1.bf16.msra.mxu0 0
  %297 = vmatprep.subr.bf16.mxu0 0
  %298 = vmatpush1.bf16.msra.mxu0 0
  %299 = vmatprep.subr.bf16.mxu0 0
  %300 = vmatpush1.bf16.msra.mxu0 0
  %301 = vmatprep.subr.bf16.mxu0 0
  %302 = vmatpush1.bf16.msra.mxu0 0
  %303 = vmatprep.mubr.bf16.mxu0 %v256
  %304 = vmatmul.mubr.bf16.gmra.mrb[0].mxu0 %v61
  %v305 = vpop.f32.mrb[0].mxu0
  %v306 = vadd.f32 0.0, %v305
  %v307 = vpop.f32.mrb[0].mxu0
  %v308 = vadd.f32 0.0, %v307
  %v309 = vpop.f32.mrb[0].mxu0
  %v310 = vadd.f32 0.0, %v309
  %v311 = vpop.f32.mrb[0].mxu0
  %v312 = vadd.f32 0.0, %v311
  %313 = vdwg.mxu0
  %314 = vmatprep.subr.bf16.mxu0 %v181
  %315 = vmatpush1.bf16.msra.mxu0 %v180
  %316 = vmatprep.subr.bf16.mxu0 %v185
  %317 = vmatpush1.bf16.msra.mxu0 %v184
  %318 = vmatprep.subr.bf16.mxu0 %v189
  %319 = vmatpush1.bf16.msra.mxu0 %v188
  %320 = vmatprep.subr.bf16.mxu0 %v193
  %321 = vmatpush1.bf16.msra.mxu0 %v192
  %322 = vmatprep.subr.bf16.mxu0 %v197
  %323 = vmatpush1.bf16.msra.mxu0 %v196
  %324 = vmatprep.subr.bf16.mxu0 %v201
  %325 = vmatpush1.bf16.msra.mxu0 %v200
  %326 = vmatprep.subr.bf16.mxu0 %v205
  %327 = vmatpush1.bf16.msra.mxu0 %v204
  %328 = vmatprep.subr.bf16.mxu0 %v209
  %329 = vmatpush1.bf16.msra.mxu0 %v208
  %330 = vmatprep.subr.bf16.mxu0 %v213
  %331 = vmatpush1.bf16.msra.mxu0 %v212
  %332 = vmatprep.subr.bf16.mxu0 %v269
  %333 = vmatpush1.bf16.msra.mxu0 %v266
  %334 = vmatprep.subr.bf16.mxu0 0
  %335 = vmatpush1.bf16.msra.mxu0 0
  %336 = vmatprep.subr.bf16.mxu0 0
  %337 = vmatpush1.bf16.msra.mxu0 0
  %338 = vmatprep.subr.bf16.mxu0 0
  %339 = vmatpush1.bf16.msra.mxu0 0
  %340 = vmatprep.subr.bf16.mxu0 0
  %341 = vmatpush1.bf16.msra.mxu0 0
  %342 = vmatprep.subr.bf16.mxu0 0
  %343 = vmatpush1.bf16.msra.mxu0 0
  %344 = vmatprep.subr.bf16.mxu0 0
  %345 = vmatpush1.bf16.msra.mxu0 0
  %346 = vmatprep.mubr.bf16.mxu0 %v256
  %347 = vmatmul.mubr.bf16.gmra.mrb[0].mxu0 %v61
  %v348 = vpop.f32.mrb[0].mxu0
  %v349 = vadd.f32 0.0, %v348
  %v350 = vpop.f32.mrb[0].mxu0
  %v351 = vadd.f32 0.0, %v350
  %v352 = vpop.f32.mrb[0].mxu0
  %v353 = vadd.f32 0.0, %v352
  %v354 = vpop.f32.mrb[0].mxu0
  %v355 = vadd.f32 0.0, %v354
  %356 = vdwg.mxu0
  %v357 = vmax.f32 %v306, %v308
  %v358 = vmax.f32 %v310, %v312
  %v359 = vmax.f32 %v349, %v351
  %v360 = vmax.f32 %v353, %v355
  %v361 = vmax.f32 %v357, %v359
  %v362 = vmax.f32 %v358, %v360
  %v363 = vld [vmem:[%s1] sm:$0xff]
  %v364 = vld [vmem:[%s1 + $0x8] sm:$0xff]
  %366 = vset.pattern.permute.xlu0 0
  %367 = vperm.xlu0 %366, %v363
  %v368 = vpop.permute.xlu0 %367
  %371 = vset.pattern.permute.xlu0 0
  %372 = vperm.xlu0 %371, %v364
  %v373 = vpop.permute.xlu0 %372
  %v375 = vadd.f32 %v361, %v368
  %v376 = vadd.f32 %v362, %v373
  %v377 = vmax.f32 %v375, 0.0
  %v378 = vmax.f32 %v376, 0.0
  %379 = vst [vmem:[%s3] sm:$0xff] %v377
  %380 = vst [vmem:[%s3 + $0x8] sm:$0xff] %v378
  // Predicated region
  $region14: #{lenet_adv_forward.4} parent=0 // pred_check
    _
  $region15: #{lenet_adv_forward.4} parent=0 // pred_check_branch
    %382 = sbr.rel (0) target = $region17
  $region16: #{lenet_adv_forward.4} parent=0 // pred_region
    _
  $region17: #{lenet_adv_forward.4} parent=0 // pred_fallthru
    _
  // Predicated region
  $region18: #{lenet_adv_forward.4} parent=0 // pred_check
    _
  $region19: #{lenet_adv_forward.4} parent=0 // pred_check_branch
    %384 = sbr.rel (0) target = $region21
  $region20: #{lenet_adv_forward.4} parent=0 // pred_region
    _
  $region21: #{lenet_adv_forward.4} parent=0 // pred_fallthru
    _

// kernel: lenet_adv_forward.5
$region0: #{lenet_adv_forward.5}
  #allocation0 [shape = 'u32[]', space=smem, size = 0x4, offset = 0x4, fixed_abs, tag = 'smem constant byte address 0x4 - core index']
  #allocation1 [shape = 'u32[144,128]{1,0:T(1,128)}', space=vmem, size = 0x12000, scoped, tag = 'internal scratch']
  %s0 = inlined_call_operand.vmem [shape: bf16[2,512], index: 0, kind: input, shape index: {}]
  %s1 = inlined_call_operand.vmem [shape: bf16[512,128], index: 1, kind: input, shape index: {}]
  %s2 = inlined_call_operand.vmem [shape: f32[1,128], index: 2, kind: input, shape index: {}]
  %s3 = inlined_call_operand.vmem [shape: bf16[128,128], index: 3, kind: input, shape index: {}]
  %s4 = inlined_call_operand.vmem [shape: f32[1,128], index: 4, kind: input, shape index: {}]
  %s5 = inlined_call_operand.vmem [shape: bf16[128,128], index: 5, kind: input, shape index: {}]
  %s6 = inlined_call_operand.vmem [shape: f32[1,128], index: 6, kind: input, shape index: {}]
  %s7 = inlined_call_operand.hbm [shape: f32[2,128], index: 7, kind: output, shape index: {}]
  %s8 = sld [smem:[#allocation0]]
  $region38: #{lenet_adv_forward.5} parent=0
    _
  %s10 = ssub.s32 1, %s8
  %s11 = scalar_select 0, %s10, %s8
  $region1: #{lenet_adv_forward.5} parent=0
    #allocation2 [shape = 'u8[1024]{0}', space=vmem, size = 0x400, scoped, tag = 'output window, operand 0, single buffered']
    #allocation3 [shape = 's32[1]{0}', space=sflag, size = 0x4, scoped, tag = 'scoped memory for lenet_adv_forward.5']
    %12 = vsyncpa [#allocation3], 0
    // Predicated region
    $region2: #{lenet_adv_forward.5} parent=1 // pred_check
      _
    $region3: #{lenet_adv_forward.5} parent=1 // pred_check_branch
      %14 = sbr.rel (0) target = $region5
    $region4: #{lenet_adv_forward.5} parent=1 // pred_region
      _
    $region5: #{lenet_adv_forward.5} parent=1 // pred_fallthru
      _
    // Predicated region
    $region6: #{lenet_adv_forward.5} parent=1 // pred_check
      _
    $region7: #{lenet_adv_forward.5} parent=1 // pred_check_branch
      %16 = sbr.rel (0) target = $region9
    $region8: #{lenet_adv_forward.5} parent=1 // pred_region
      _
    $region9: #{lenet_adv_forward.5} parent=1 // pred_fallthru
      _
    // Predicated region
    $region10: #{lenet_adv_forward.5} parent=1 // pred_check
      _
    $region11: #{lenet_adv_forward.5} parent=1 // pred_check_branch
      %18 = sbr.rel (0) target = $region13
    $region12: #{lenet_adv_forward.5} parent=1 // pred_region
      _
    $region13: #{lenet_adv_forward.5} parent=1 // pred_fallthru
      _
    // Predicated region
    $region14: #{lenet_adv_forward.5} parent=1 // pred_check
      _
    $region15: #{lenet_adv_forward.5} parent=1 // pred_check_branch
      %20 = sbr.rel (0) target = $region17
    $region16: #{lenet_adv_forward.5} parent=1 // pred_region
      _
    $region17: #{lenet_adv_forward.5} parent=1 // pred_fallthru
      _
    // Predicated region
    $region18: #{lenet_adv_forward.5} parent=1 // pred_check
      _
    $region19: #{lenet_adv_forward.5} parent=1 // pred_check_branch
      %22 = sbr.rel (0) target = $region21
    $region20: #{lenet_adv_forward.5} parent=1 // pred_region
      _
    $region21: #{lenet_adv_forward.5} parent=1 // pred_fallthru
      _
    // Predicated region
    $region22: #{lenet_adv_forward.5} parent=1 // pred_check
      _
    $region23: #{lenet_adv_forward.5} parent=1 // pred_check_branch
      %24 = sbr.rel (0) target = $region25
    $region24: #{lenet_adv_forward.5} parent=1 // pred_region
      _
    $region25: #{lenet_adv_forward.5} parent=1 // pred_fallthru
      _
    // Predicated region
    $region26: #{lenet_adv_forward.5} parent=1 // pred_check
      _
    $region27: #{lenet_adv_forward.5} parent=1 // pred_check_branch
      %26 = sbr.rel (0) target = $region29
    $region28: #{lenet_adv_forward.5} parent=1 // pred_region
      _
    $region29: #{lenet_adv_forward.5} parent=1 // pred_fallthru
      _
    %v28 = vld [vmem:[%s0] sm:$0xf]
    %v29 = vld [vmem:[%s1] sm:$0xf]
    %v30 = vld [vmem:[%s1 + $0x4] sm:$0xf]
    %v31 = vld [vmem:[%s1 + $0x8] sm:$0xf]
    %v32 = vld [vmem:[%s1 + $0xc] sm:$0xf]
    %v33 = vld [vmem:[%s1 + $0x10] sm:$0xf]
    %v34 = vld [vmem:[%s1 + $0x14] sm:$0xf]
    %v35 = vld [vmem:[%s1 + $0x18] sm:$0xf]
    %v36 = vld [vmem:[%s1 + $0x1c] sm:$0xf]
    %v37 = vld [vmem:[%s1 + $0x20] sm:$0xf]
    %v38 = vld [vmem:[%s1 + $0x24] sm:$0xf]
    %v39 = vld [vmem:[%s1 + $0x28] sm:$0xf]
    %v40 = vld [vmem:[%s1 + $0x2c] sm:$0xf]
    %v41 = vld [vmem:[%s1 + $0x30] sm:$0xf]
    %v42 = vld [vmem:[%s1 + $0x34] sm:$0xf]
    %v43 = vld [vmem:[%s1 + $0x38] sm:$0xf]
    %v44 = vld [vmem:[%s1 + $0x3c] sm:$0xf]
    %v45 = vld [vmem:[%s1 + $0x40] sm:$0xf]
    %v46 = vld [vmem:[%s1 + $0x44] sm:$0xf]
    %v47 = vld [vmem:[%s1 + $0x48] sm:$0xf]
    %v48 = vld [vmem:[%s1 + $0x4c] sm:$0xf]
    %v49 = vld [vmem:[%s1 + $0x50] sm:$0xf]
    %v50 = vld [vmem:[%s1 + $0x54] sm:$0xf]
    %v51 = vld [vmem:[%s1 + $0x58] sm:$0xf]
    %v52 = vld [vmem:[%s1 + $0x5c] sm:$0xf]
    %v53 = vld [vmem:[%s1 + $0x60] sm:$0xf]
    %v54 = vld [vmem:[%s1 + $0x64] sm:$0xf]
    %v55 = vld [vmem:[%s1 + $0x68] sm:$0xf]
    %v56 = vld [vmem:[%s1 + $0x6c] sm:$0xf]
    %v57 = vld [vmem:[%s1 + $0x70] sm:$0xf]
    %v58 = vld [vmem:[%s1 + $0x74] sm:$0xf]
    %v59 = vld [vmem:[%s1 + $0x78] sm:$0xf]
    %v60 = vld [vmem:[%s1 + $0x7c] sm:$0xf]
    %v61 = vld [vmem:[%s1 + $0x80] sm:$0xf]
    %v62 = vld [vmem:[%s1 + $0x84] sm:$0xf]
    %v63 = vld [vmem:[%s1 + $0x88] sm:$0xf]
    %v64 = vld [vmem:[%s1 + $0x8c] sm:$0xf]
    %v65 = vld [vmem:[%s1 + $0x90] sm:$0xf]
    %v66 = vld [vmem:[%s1 + $0x94] sm:$0xf]
    %v67 = vld [vmem:[%s1 + $0x98] sm:$0xf]
    %v68 = vld [vmem:[%s1 + $0x9c] sm:$0xf]
    %v69 = vld [vmem:[%s1 + $0xa0] sm:$0xf]
    %v70 = vld [vmem:[%s1 + $0xa4] sm:$0xf]
    %v71 = vld [vmem:[%s1 + $0xa8] sm:$0xf]
    %v72 = vld [vmem:[%s1 + $0xac] sm:$0xf]
    %v73 = vld [vmem:[%s1 + $0xb0] sm:$0xf]
    %v74 = vld [vmem:[%s1 + $0xb4] sm:$0xf]
    %v75 = vld [vmem:[%s1 + $0xb8] sm:$0xf]
    %v76 = vld [vmem:[%s1 + $0xbc] sm:$0xf]
    %v77 = vld [vmem:[%s1 + $0xc0] sm:$0xf]
    %v78 = vld [vmem:[%s1 + $0xc4] sm:$0xf]
    %v79 = vld [vmem:[%s1 + $0xc8] sm:$0xf]
    %v80 = vld [vmem:[%s1 + $0xcc] sm:$0xf]
    %v81 = vld [vmem:[%s1 + $0xd0] sm:$0xf]
    %v82 = vld [vmem:[%s1 + $0xd4] sm:$0xf]
    %v83 = vld [vmem:[%s1 + $0xd8] sm:$0xf]
    %v84 = vld [vmem:[%s1 + $0xdc] sm:$0xf]
    %v85 = vld [vmem:[%s1 + $0xe0] sm:$0xf]
    %v86 = vld [vmem:[%s1 + $0xe4] sm:$0xf]
    %v87 = vld [vmem:[%s1 + $0xe8] sm:$0xf]
    %v88 = vld [vmem:[%s1 + $0xec] sm:$0xf]
    %v89 = vld [vmem:[%s1 + $0xf0] sm:$0xf]
    %v90 = vld [vmem:[%s1 + $0xf4] sm:$0xf]
    %v91 = vld [vmem:[%s1 + $0xf8] sm:$0xf]
    %v92 = vld [vmem:[%s1 + $0xfc] sm:$0xf]
    %v93 = vld [vmem:[%s2] sm:$0x1]
    %v95 = vlaneseq
    %v96 = vshrl.u32 %v95, 7
    %v97 = vsub.s32 0, %v96
    %v98 = vrot.slane %v93, %v97
    %v102 = vunpack.c.l.s4 1966171168
    %v103 = vunpack.c.0.s8 %v102
    %v104 = vlaneseq
    %v105 = vshrl.u32 %v104, 7
    %v106 = vsub.s32 %v103, %v105
    %v107 = vrot.slane %v28, %v106
    %v108 = vcombine.high %v107, %v107
    %v110 = vunpack.c.l.s4 1966171168
    %v111 = vunpack.c.0.s8 %v110
    %v112 = vlaneseq
    %v113 = vshrl.u32 %v112, 7
    %v114 = vsub.s32 %v111, %v113
    %v115 = vrot.slane %v107, %v114
    %v117 = vunpack.c.l.s4 1966171168
    %v118 = vunpack.c.0.s8 %v117
    %v119 = vlaneseq
    %v120 = vshrl.u32 %v119, 7
    %v121 = vsub.s32 %v118, %v120
    %v122 = vrot.slane %v108, %v121
    %v123 = vcombine.high %v115, %v115
    %v124 = vcombine.high %v122, %v122
    %v193 = vunpack.c.l.b16 %v29
    %v194 = vunpack.c.l.b16 %v30
    %v195 = vunpack.c.l.b16 %v31
    %v196 = vunpack.c.l.b16 %v32
    %v197 = vunpack.c.l.b16 %v33
    %v198 = vunpack.c.l.b16 %v34
    %v199 = vunpack.c.l.b16 %v35
    %v200 = vunpack.c.l.b16 %v36
    %v201 = vunpack.c.l.b16 %v37
    %v202 = vunpack.c.l.b16 %v38
    %v203 = vunpack.c.l.b16 %v39
    %v204 = vunpack.c.l.b16 %v40
    %v205 = vunpack.c.l.b16 %v41
    %v206 = vunpack.c.l.b16 %v42
    %v207 = vunpack.c.l.b16 %v43
    %v208 = vunpack.c.l.b16 %v44
    %v209 = vunpack.c.l.b16 %v45
    %v210 = vunpack.c.l.b16 %v46
    %v211 = vunpack.c.l.b16 %v47
    %v212 = vunpack.c.l.b16 %v48
    %v213 = vunpack.c.l.b16 %v49
    %v214 = vunpack.c.l.b16 %v50
    %v215 = vunpack.c.l.b16 %v51
    %v216 = vunpack.c.l.b16 %v52
    %v217 = vunpack.c.l.b16 %v53
    %v218 = vunpack.c.l.b16 %v54
    %v219 = vunpack.c.l.b16 %v55
    %v220 = vunpack.c.l.b16 %v56
    %v221 = vunpack.c.l.b16 %v57
    %v222 = vunpack.c.l.b16 %v58
    %v223 = vunpack.c.l.b16 %v59
    %v224 = vunpack.c.l.b16 %v60
    %v225 = vunpack.c.l.b16 %v61
    %v226 = vunpack.c.l.b16 %v62
    %v227 = vunpack.c.l.b16 %v63
    %v228 = vunpack.c.l.b16 %v64
    %v229 = vunpack.c.l.b16 %v65
    %v230 = vunpack.c.l.b16 %v66
    %v231 = vunpack.c.l.b16 %v67
    %v232 = vunpack.c.l.b16 %v68
    %v233 = vunpack.c.l.b16 %v69
    %v234 = vunpack.c.l.b16 %v70
    %v235 = vunpack.c.l.b16 %v71
    %v236 = vunpack.c.l.b16 %v72
    %v237 = vunpack.c.l.b16 %v73
    %v238 = vunpack.c.l.b16 %v74
    %v239 = vunpack.c.l.b16 %v75
    %v240 = vunpack.c.l.b16 %v76
    %v241 = vunpack.c.l.b16 %v77
    %v242 = vunpack.c.l.b16 %v78
    %v243 = vunpack.c.l.b16 %v79
    %v244 = vunpack.c.l.b16 %v80
    %v245 = vunpack.c.l.b16 %v81
    %v246 = vunpack.c.l.b16 %v82
    %v247 = vunpack.c.l.b16 %v83
    %v248 = vunpack.c.l.b16 %v84
    %v249 = vunpack.c.l.b16 %v85
    %v250 = vunpack.c.l.b16 %v86
    %v251 = vunpack.c.l.b16 %v87
    %v252 = vunpack.c.l.b16 %v88
    %v253 = vunpack.c.l.b16 %v89
    %v254 = vunpack.c.l.b16 %v90
    %v255 = vunpack.c.l.b16 %v91
    %v256 = vunpack.c.l.b16 %v92
    %v257 = vpack.c.b16 %v194, %v193
    %v258 = vpack.c.b16 %v196, %v195
    %v259 = vpack.c.b16 %v198, %v197
    %v260 = vpack.c.b16 %v200, %v199
    %v261 = vpack.c.b16 %v202, %v201
    %v262 = vpack.c.b16 %v204, %v203
    %v263 = vpack.c.b16 %v206, %v205
    %v264 = vpack.c.b16 %v208, %v207
    %v265 = vpack.c.b16 %v210, %v209
    %v266 = vpack.c.b16 %v212, %v211
    %v267 = vpack.c.b16 %v214, %v213
    %v268 = vpack.c.b16 %v216, %v215
    %v269 = vpack.c.b16 %v218, %v217
    %v270 = vpack.c.b16 %v220, %v219
    %v271 = vpack.c.b16 %v222, %v221
    %v272 = vpack.c.b16 %v224, %v223
    %v273 = vpack.c.b16 %v226, %v225
    %v274 = vpack.c.b16 %v228, %v227
    %v275 = vpack.c.b16 %v230, %v229
    %v276 = vpack.c.b16 %v232, %v231
    %v277 = vpack.c.b16 %v234, %v233
    %v278 = vpack.c.b16 %v236, %v235
    %v279 = vpack.c.b16 %v238, %v237
    %v280 = vpack.c.b16 %v240, %v239
    %v281 = vpack.c.b16 %v242, %v241
    %v282 = vpack.c.b16 %v244, %v243
    %v283 = vpack.c.b16 %v246, %v245
    %v284 = vpack.c.b16 %v248, %v247
    %v285 = vpack.c.b16 %v250, %v249
    %v286 = vpack.c.b16 %v252, %v251
    %v287 = vpack.c.b16 %v254, %v253
    %v288 = vpack.c.b16 %v256, %v255
    %321 = vmatprep.subr.bf16.mxu0 0
    %322 = vmatpush1.bf16.msra.mxu0 %v257
    %323 = vmatprep.subr.bf16.mxu0 0
    %324 = vmatpush1.bf16.msra.mxu0 %v258
    %325 = vmatprep.subr.bf16.mxu0 0
    %326 = vmatpush1.bf16.msra.mxu0 %v259
    %327 = vmatprep.subr.bf16.mxu0 0
    %328 = vmatpush1.bf16.msra.mxu0 %v260
    %329 = vmatprep.subr.bf16.mxu0 0
    %330 = vmatpush1.bf16.msra.mxu0 %v261
    %331 = vmatprep.subr.bf16.mxu0 0
    %332 = vmatpush1.bf16.msra.mxu0 %v262
    %333 = vmatprep.subr.bf16.mxu0 0
    %334 = vmatpush1.bf16.msra.mxu0 %v263
    %335 = vmatprep.subr.bf16.mxu0 0
    %336 = vmatpush1.bf16.msra.mxu0 %v264
    %337 = vmatprep.subr.bf16.mxu0 0
    %338 = vmatpush1.bf16.msra.mxu0 %v265
    %339 = vmatprep.subr.bf16.mxu0 0
    %340 = vmatpush1.bf16.msra.mxu0 %v266
    %341 = vmatprep.subr.bf16.mxu0 0
    %342 = vmatpush1.bf16.msra.mxu0 %v267
    %343 = vmatprep.subr.bf16.mxu0 0
    %344 = vmatpush1.bf16.msra.mxu0 %v268
    %345 = vmatprep.subr.bf16.mxu0 0
    %346 = vmatpush1.bf16.msra.mxu0 %v269
    %347 = vmatprep.subr.bf16.mxu0 0
    %348 = vmatpush1.bf16.msra.mxu0 %v270
    %349 = vmatprep.subr.bf16.mxu0 0
    %350 = vmatpush1.bf16.msra.mxu0 %v271
    %351 = vmatprep.subr.bf16.mxu0 0
    %352 = vmatpush1.bf16.msra.mxu0 %v272
    %353 = vmatprep.mubr.bf16.mxu0 %v122
    %354 = vmatmul.mubr.bf16.gmra.mrb[0].mxu0 %v115
    %v355 = vpop.f32.mrb[0].mxu0
    %v356 = vadd.f32 %v98, %v355
    %v357 = vpop.f32.mrb[0].mxu0
    %v358 = vpop.f32.mrb[0].mxu0
    %v359 = vpop.f32.mrb[0].mxu0
    %360 = vdwg.mxu0
    %361 = vmatprep.subr.bf16.mxu0 0
    %362 = vmatpush1.bf16.msra.mxu0 %v273
    %363 = vmatprep.subr.bf16.mxu0 0
    %364 = vmatpush1.bf16.msra.mxu0 %v274
    %365 = vmatprep.subr.bf16.mxu0 0
    %366 = vmatpush1.bf16.msra.mxu0 %v275
    %367 = vmatprep.subr.bf16.mxu0 0
    %368 = vmatpush1.bf16.msra.mxu0 %v276
    %369 = vmatprep.subr.bf16.mxu0 0
    %370 = vmatpush1.bf16.msra.mxu0 %v277
    %371 = vmatprep.subr.bf16.mxu0 0
    %372 = vmatpush1.bf16.msra.mxu0 %v278
    %373 = vmatprep.subr.bf16.mxu0 0
    %374 = vmatpush1.bf16.msra.mxu0 %v279
    %375 = vmatprep.subr.bf16.mxu0 0
    %376 = vmatpush1.bf16.msra.mxu0 %v280
    %377 = vmatprep.subr.bf16.mxu0 0
    %378 = vmatpush1.bf16.msra.mxu0 %v281
    %379 = vmatprep.subr.bf16.mxu0 0
    %380 = vmatpush1.bf16.msra.mxu0 %v282
    %381 = vmatprep.subr.bf16.mxu0 0
    %382 = vmatpush1.bf16.msra.mxu0 %v283
    %383 = vmatprep.subr.bf16.mxu0 0
    %384 = vmatpush1.bf16.msra.mxu0 %v284
    %385 = vmatprep.subr.bf16.mxu0 0
    %386 = vmatpush1.bf16.msra.mxu0 %v285
    %387 = vmatprep.subr.bf16.mxu0 0
    %388 = vmatpush1.bf16.msra.mxu0 %v286
    %389 = vmatprep.subr.bf16.mxu0 0
    %390 = vmatpush1.bf16.msra.mxu0 %v287
    %391 = vmatprep.subr.bf16.mxu0 0
    %392 = vmatpush1.bf16.msra.mxu0 %v288
    %393 = vmatprep.mubr.bf16.mxu0 %v124
    %394 = vmatmul.mubr.bf16.gmra.mrb[0].mxu0 %v123
    %v395 = vpop.f32.mrb[0].mxu0
    %v396 = vadd.f32 %v356, %v395
    %v397 = vpop.f32.mrb[0].mxu0
    %v398 = vpop.f32.mrb[0].mxu0
    %v399 = vpop.f32.mrb[0].mxu0
    %400 = vdwg.mxu0
    %v401 = vmax.f32 %v396, 0.0
    %v402 = vpack.c.bf16 %v401, %v401
    %v403 = vld [vmem:[%s3] sm:$0xf]
    %v404 = vld [vmem:[%s3 + $0x4] sm:$0xf]
    %v405 = vld [vmem:[%s3 + $0x8] sm:$0xf]
    %v406 = vld [vmem:[%s3 + $0xc] sm:$0xf]
    %v407 = vld [vmem:[%s3 + $0x10] sm:$0xf]
    %v408 = vld [vmem:[%s3 + $0x14] sm:$0xf]
    %v409 = vld [vmem:[%s3 + $0x18] sm:$0xf]
    %v410 = vld [vmem:[%s3 + $0x1c] sm:$0xf]
    %v411 = vld [vmem:[%s3 + $0x20] sm:$0xf]
    %v412 = vld [vmem:[%s3 + $0x24] sm:$0xf]
    %v413 = vld [vmem:[%s3 + $0x28] sm:$0xf]
    %v414 = vld [vmem:[%s3 + $0x2c] sm:$0xf]
    %v415 = vld [vmem:[%s3 + $0x30] sm:$0xf]
    %v416 = vld [vmem:[%s3 + $0x34] sm:$0xf]
    %v417 = vld [vmem:[%s3 + $0x38] sm:$0xf]
    %v418 = vld [vmem:[%s3 + $0x3c] sm:$0xf]
    %v419 = vld [vmem:[%s4] sm:$0x1]
    %v421 = vlaneseq
    %v422 = vshrl.u32 %v421, 7
    %v423 = vsub.s32 0, %v422
    %v424 = vrot.slane %v419, %v423
    %v442 = vunpack.c.l.b16 %v403
    %v443 = vunpack.c.l.b16 %v404
    %v444 = vunpack.c.l.b16 %v405
    %v445 = vunpack.c.l.b16 %v406
    %v446 = vunpack.c.l.b16 %v407
    %v447 = vunpack.c.l.b16 %v408
    %v448 = vunpack.c.l.b16 %v409
    %v449 = vunpack.c.l.b16 %v410
    %v450 = vunpack.c.l.b16 %v411
    %v451 = vunpack.c.l.b16 %v412
    %v452 = vunpack.c.l.b16 %v413
    %v453 = vunpack.c.l.b16 %v414
    %v454 = vunpack.c.l.b16 %v415
    %v455 = vunpack.c.l.b16 %v416
    %v456 = vunpack.c.l.b16 %v417
    %v457 = vunpack.c.l.b16 %v418
    %v458 = vpack.c.b16 %v443, %v442
    %v459 = vpack.c.b16 %v445, %v444
    %v460 = vpack.c.b16 %v447, %v446
    %v461 = vpack.c.b16 %v449, %v448
    %v462 = vpack.c.b16 %v451, %v450
    %v463 = vpack.c.b16 %v453, %v452
    %v464 = vpack.c.b16 %v455, %v454
    %v465 = vpack.c.b16 %v457, %v456
    %474 = vmatprep.subr.bf16.mxu0 0
    %475 = vmatpush1.bf16.msra.mxu0 %v458
    %476 = vmatprep.subr.bf16.mxu0 0
    %477 = vmatpush1.bf16.msra.mxu0 %v459
    %478 = vmatprep.subr.bf16.mxu0 0
    %479 = vmatpush1.bf16.msra.mxu0 %v460
    %480 = vmatprep.subr.bf16.mxu0 0
    %481 = vmatpush1.bf16.msra.mxu0 %v461
    %482 = vmatprep.subr.bf16.mxu0 0
    %483 = vmatpush1.bf16.msra.mxu0 %v462
    %484 = vmatprep.subr.bf16.mxu0 0
    %485 = vmatpush1.bf16.msra.mxu0 %v463
    %486 = vmatprep.subr.bf16.mxu0 0
    %487 = vmatpush1.bf16.msra.mxu0 %v464
    %488 = vmatprep.subr.bf16.mxu0 0
    %489 = vmatpush1.bf16.msra.mxu0 %v465
    %490 = vmatprep.subr.bf16.mxu0 0
    %491 = vmatpush1.bf16.msra.mxu0 0
    %492 = vmatprep.subr.bf16.mxu0 0
    %493 = vmatpush1.bf16.msra.mxu0 0
    %494 = vmatprep.subr.bf16.mxu0 0
    %495 = vmatpush1.bf16.msra.mxu0 0
    %496 = vmatprep.subr.bf16.mxu0 0
    %497 = vmatpush1.bf16.msra.mxu0 0
    %498 = vmatprep.subr.bf16.mxu0 0
    %499 = vmatpush1.bf16.msra.mxu0 0
    %500 = vmatprep.subr.bf16.mxu0 0
    %501 = vmatpush1.bf16.msra.mxu0 0
    %502 = vmatprep.subr.bf16.mxu0 0
    %503 = vmatpush1.bf16.msra.mxu0 0
    %504 = vmatprep.subr.bf16.mxu0 0
    %505 = vmatpush1.bf16.msra.mxu0 0
    %506 = vmatprep.mubr.bf16.mxu0 0
    %507 = vmatmul.mubr.bf16.gmra.mrb[0].mxu0 %v402
    %v508 = vpop.f32.mrb[0].mxu0
    %v509 = vadd.f32 %v424, %v508
    %v510 = vpop.f32.mrb[0].mxu0
    %v511 = vpop.f32.mrb[0].mxu0
    %v512 = vpop.f32.mrb[0].mxu0
    %513 = vdwg.mxu0
    %v514 = vmax.f32 %v509, 0.0
    %v515 = vpack.c.bf16 %v514, %v514
    %v516 = vld [vmem:[%s5] sm:$0xf]
    %v517 = vld [vmem:[%s5 + $0x4] sm:$0xf]
    %v518 = vld [vmem:[%s5 + $0x8] sm:$0xf]
    %v519 = vld [vmem:[%s5 + $0xc] sm:$0xf]
    %v520 = vld [vmem:[%s5 + $0x10] sm:$0xf]
    %v521 = vld [vmem:[%s5 + $0x14] sm:$0xf]
    %v522 = vld [vmem:[%s5 + $0x18] sm:$0xf]
    %v523 = vld [vmem:[%s5 + $0x1c] sm:$0xf]
    %v524 = vld [vmem:[%s5 + $0x20] sm:$0xf]
    %v525 = vld [vmem:[%s5 + $0x24] sm:$0xf]
    %v526 = vld [vmem:[%s5 + $0x28] sm:$0xf]
    %v527 = vld [vmem:[%s5 + $0x2c] sm:$0xf]
    %v528 = vld [vmem:[%s5 + $0x30] sm:$0xf]
    %v529 = vld [vmem:[%s5 + $0x34] sm:$0xf]
    %v530 = vld [vmem:[%s5 + $0x38] sm:$0xf]
    %v531 = vld [vmem:[%s5 + $0x3c] sm:$0xf]
    %v532 = vld [vmem:[%s6] sm:$0x1]
    %v534 = vlaneseq
    %v535 = vshrl.u32 %v534, 7
    %v536 = vsub.s32 0, %v535
    %v537 = vrot.slane %v532, %v536
    %v555 = vunpack.c.l.b16 %v516
    %v556 = vunpack.c.l.b16 %v517
    %v557 = vunpack.c.l.b16 %v518
    %v558 = vunpack.c.l.b16 %v519
    %v559 = vunpack.c.l.b16 %v520
    %v560 = vunpack.c.l.b16 %v521
    %v561 = vunpack.c.l.b16 %v522
    %v562 = vunpack.c.l.b16 %v523
    %v563 = vunpack.c.l.b16 %v524
    %v564 = vunpack.c.l.b16 %v525
    %v565 = vunpack.c.l.b16 %v526
    %v566 = vunpack.c.l.b16 %v527
    %v567 = vunpack.c.l.b16 %v528
    %v568 = vunpack.c.l.b16 %v529
    %v569 = vunpack.c.l.b16 %v530
    %v570 = vunpack.c.l.b16 %v531
    %v571 = vpack.c.b16 %v556, %v555
    %v572 = vpack.c.b16 %v558, %v557
    %v573 = vpack.c.b16 %v560, %v559
    %v574 = vpack.c.b16 %v562, %v561
    %v575 = vpack.c.b16 %v564, %v563
    %v576 = vpack.c.b16 %v566, %v565
    %v577 = vpack.c.b16 %v568, %v567
    %v578 = vpack.c.b16 %v570, %v569
    %587 = vmatprep.subr.bf16.mxu0 0
    %588 = vmatpush1.bf16.msra.mxu0 %v571
    %589 = vmatprep.subr.bf16.mxu0 0
    %590 = vmatpush1.bf16.msra.mxu0 %v572
    %591 = vmatprep.subr.bf16.mxu0 0
    %592 = vmatpush1.bf16.msra.mxu0 %v573
    %593 = vmatprep.subr.bf16.mxu0 0
    %594 = vmatpush1.bf16.msra.mxu0 %v574
    %595 = vmatprep.subr.bf16.mxu0 0
    %596 = vmatpush1.bf16.msra.mxu0 %v575
    %597 = vmatprep.subr.bf16.mxu0 0
    %598 = vmatpush1.bf16.msra.mxu0 %v576
    %599 = vmatprep.subr.bf16.mxu0 0
    %600 = vmatpush1.bf16.msra.mxu0 %v577
    %601 = vmatprep.subr.bf16.mxu0 0
    %602 = vmatpush1.bf16.msra.mxu0 %v578
    %603 = vmatprep.subr.bf16.mxu0 0
    %604 = vmatpush1.bf16.msra.mxu0 0
    %605 = vmatprep.subr.bf16.mxu0 0
    %606 = vmatpush1.bf16.msra.mxu0 0
    %607 = vmatprep.subr.bf16.mxu0 0
    %608 = vmatpush1.bf16.msra.mxu0 0
    %609 = vmatprep.subr.bf16.mxu0 0
    %610 = vmatpush1.bf16.msra.mxu0 0
    %611 = vmatprep.subr.bf16.mxu0 0
    %612 = vmatpush1.bf16.msra.mxu0 0
    %613 = vmatprep.subr.bf16.mxu0 0
    %614 = vmatpush1.bf16.msra.mxu0 0
    %615 = vmatprep.subr.bf16.mxu0 0
    %616 = vmatpush1.bf16.msra.mxu0 0
    %617 = vmatprep.subr.bf16.mxu0 0
    %618 = vmatpush1.bf16.msra.mxu0 0
    %619 = vmatprep.mubr.bf16.mxu0 0
    %620 = vmatmul.mubr.bf16.gmra.mrb[0].mxu0 %v515
    %v621 = vpop.f32.mrb[0].mxu0
    %v622 = vadd.f32 %v537, %v621
    %v623 = vpop.f32.mrb[0].mxu0
    %v624 = vpop.f32.mrb[0].mxu0
    %v625 = vpop.f32.mrb[0].mxu0
    %626 = vdwg.mxu0
    %627 = vst [vmem:[#allocation2] sm:$0x3] %v622
    // Predicated region
    $region30: #{lenet_adv_forward.5} parent=1 // pred_check
      _
    $region31: #{lenet_adv_forward.5} parent=1 // pred_check_branch
      %629 = sbr.rel (0) target = $region33
    $region32: #{lenet_adv_forward.5} parent=1 // pred_region
      %s631 = ssub.s32 32, 32
      %632 = vsyncadd [#allocation3], %s631
      %s634 = sshll.u32 [#allocation2], 4
      %s635 = int_to_ptr.vmem [resolvable:$true] %s634
      %637 = dma.vmem_to_hbm [thread:$0]  %s635, 32, %s7, [#allocation3]
    $region33: #{lenet_adv_forward.5} parent=1 // pred_fallthru
      _
    // Predicated region
    $region34: #{lenet_adv_forward.5} parent=1 // pred_check
      _
    $region35: #{lenet_adv_forward.5} parent=1 // pred_check_branch
      %639 = sbr.rel (0) target = $region37
    $region36: #{lenet_adv_forward.5} parent=1 // pred_region
      %640 = dma.done [#allocation3], 32
    $region37: #{lenet_adv_forward.5} parent=1 // pred_fallthru
      _
    %641 = vsyncpa [#allocation3], 1

</llo_original>
